<compile_context>
chip_gen: v6e
topology: v6e:2x2x1
jax: 0.10.0
libtpu: 0.0.40
codegen_flags: <defaults>
</compile_context>

<pallas_src>
import functools
import math

import jax
import jax.numpy as jnp
from jax.experimental import pallas as pl
from jax.experimental.pallas import tpu as pltpu


def fused_encoder_kernel(x_ref, wqkv_ref, bqkv_ref, wo_ref, w1_ref, b1_ref,
                         w2_ref, vec_ref, o_ref, ctx_ref, *, n_heads):
    layer = pl.program_id(1)

    @pl.when(layer == 0)
    def _():
        o_ref[...] = x_ref[...].astype(o_ref.dtype)

    x = o_ref[...].astype(jnp.float32)            # (Bt, S, D), resident across layers
    Bt, S, D = x.shape
    H = n_heads
    Dh = D // H

    x2 = x.reshape(Bt * S, D)                     # merge batch rows -> matmul M dim
    x_bf = x2.astype(jnp.bfloat16)

    # --- fused Q/K/V projection: one full-width MXU matmul ------------------
    # (1/sqrt(Dh) already folded into the Q columns of wqkv / bqkv at init)
    qkv = jnp.dot(x_bf, wqkv_ref[0],
                  preferred_element_type=jnp.float32) + bqkv_ref[0]   # (M, 3D) f32

    # --- attention per (batch row, head): 2-D MXU matmuls only ---------------
    for b in range(Bt):
        r0 = b * S
        for h in range(H):
            c0 = h * Dh
            q = qkv[r0:r0 + S, c0:c0 + Dh].astype(jnp.bfloat16)              # (S, Dh)
            k = qkv[r0:r0 + S, D + c0:D + c0 + Dh].astype(jnp.bfloat16)
            v = qkv[r0:r0 + S, 2 * D + c0:2 * D + c0 + Dh].astype(jnp.bfloat16)
            s = jnp.einsum('qe,ke->qk', q, k,
                           preferred_element_type=jnp.float32)               # (S, S)
            s = s - jnp.max(s, axis=-1, keepdims=True)
            p = jnp.exp(s)
            denom = jnp.sum(p, axis=-1, keepdims=True)                       # (S, 1)
            ctx = jnp.dot(p.astype(jnp.bfloat16), v,
                          preferred_element_type=jnp.float32)                # (S, Dh)
            # deferred softmax normalization: S*Dh multiplies instead of S*S
            ctx_ref[r0:r0 + S, c0:c0 + Dh] = ctx * pl.reciprocal(denom, approx=True)

    vecs = vec_ref[0]                             # (6, D): bo, g1, be1, b2, g2, be2

    # --- output projection: head reduction happens inside the MXU K dim -----
    attn = jnp.dot(ctx_ref[...].astype(jnp.bfloat16), wo_ref[0],
                   preferred_element_type=jnp.float32) + vecs[0:1, :]        # (M, D)
    # TODO(synk): dropout omitted (inference / eval-mode identity).

    # --- residual + LayerNorm 1 (f32 elementwise) ----------------------------
    y = x2 + attn
    mu = jnp.mean(y, axis=-1, keepdims=True)
    var = jnp.mean((y - mu) * (y - mu), axis=-1, keepdims=True)
    y = (y - mu) * jax.lax.rsqrt(var + 1e-5)
    y = y * vecs[1:2, :] + vecs[2:3, :]

    # --- FFN: Linear -> ReLU -> Linear ---------------------------------------
    h1 = jnp.dot(y.astype(jnp.bfloat16), w1_ref[0],
                 preferred_element_type=jnp.float32) + b1_ref[0]
    h1 = jnp.maximum(h1, 0.0)
    ff = jnp.dot(h1.astype(jnp.bfloat16), w2_ref[0],
                 preferred_element_type=jnp.float32) + vecs[3:4, :]

    # --- residual + LayerNorm 2 ----------------------------------------------
    z = y + ff
    mu2 = jnp.mean(z, axis=-1, keepdims=True)
    var2 = jnp.mean((z - mu2) * (z - mu2), axis=-1, keepdims=True)
    z = (z - mu2) * jax.lax.rsqrt(var2 + 1e-5)
    z = z * vecs[4:5, :] + vecs[5:6, :]

    o_ref[...] = z.reshape(Bt, S, D).astype(o_ref.dtype)


def _pick_batch_block(B, S, D, H):
    """Largest divisor of B that keeps the unrolled attention and the
    activation block modest.  (Bt > 1 amortizes per-layer weight DMA and
    raises the matmul M dimension; on v7x with B//Bt == 1 one TC may idle —
    acceptable trade at small B.)"""
    best = 1
    for d in range(1, B + 1):
        if B % d:
            continue
        if d * H > 32:                       # cap unrolled (row, head) blocks
            continue
        if d * S * D * 4 > (4 << 20):        # keep activation block <= 4 MiB
            continue
        best = d
    return best


def _vmem_limit_bytes(D, F, S, Bt):
    """Budget: double-buffered per-layer weight set + activation blocks +
    transient intermediates, clamped to ~85% of physical VMEM."""
    w_bytes = (4 * D * D + 2 * D * F) * 2 + (9 * D + F) * 4      # one layer
    act_bytes = Bt * S * D * 4
    tmp_bytes = Bt * S * (3 * D + F) * 4
    need = 2 * w_bytes + 4 * act_bytes + 2 * tmp_bytes + (4 << 20)
    try:
        cap = int(pltpu.get_tpu_info().vmem_capacity_bytes)
    except Exception:
        cap = 128 * 1024 * 1024
    # TODO(synk): if `need` exceeds ~85% of VMEM (huge D/F on v7x), split the
    # FFN weights over F with an inner pipeline instead of shrinking buffering.
    return int(min(int(cap * 0.85), max(need, 48 * 1024 * 1024)))


def encoder_forward(x, params, n_heads):
    """Run the full encoder stack in one pallas_call. x: (B, S, D)."""
    x = x.astype(jnp.float32)
    B, S, D = x.shape
    L = params["wqkv"].shape[0]
    F = params["w1"].shape[-1]
    assert D % n_heads == 0

    Bt = _pick_batch_block(B, S, D, n_heads)
    grid = (B // Bt, L)

    def wmap(b, l):
        return (l, 0, 0)

    in_specs = [
        pl.BlockSpec((Bt, S, D), lambda b, l: (b, 0, 0)),   # x
        pl.BlockSpec((1, D, 3 * D), wmap),                  # wqkv (bf16)
        pl.BlockSpec((1, 1, 3 * D), wmap),                  # bqkv
        pl.BlockSpec((1, D, D), wmap),                      # wo   (bf16)
        pl.BlockSpec((1, D, F), wmap),                      # w1   (bf16)
        pl.BlockSpec((1, 1, F), wmap),                      # b1
        pl.BlockSpec((1, F, D), wmap),                      # w2   (bf16)
        pl.BlockSpec((1, 6, D), wmap),                      # packed vectors
    ]

    return pl.pallas_call(
        functools.partial(fused_encoder_kernel, n_heads=n_heads),
        out_shape=jax.ShapeDtypeStruct((B, S, D), jnp.float32),
        grid_spec=pltpu.PrefetchScalarGridSpec(
            num_scalar_prefetch=0,
            grid=grid,
            in_specs=in_specs,
            out_specs=pl.BlockSpec((Bt, S, D), lambda b, l: (b, 0, 0)),
            scratch_shapes=[pltpu.VMEM((Bt * S, D), jnp.float32)],  # head-merge buf
        ),
        compiler_params=pltpu.CompilerParams(
            dimension_semantics=("parallel", "arbitrary"),
            vmem_limit_bytes=_vmem_limit_bytes(D, F, S, Bt),
        ),
    )(x, params["wqkv"], params["bqkv"], params["wo"],
      params["w1"], params["b1"], params["w2"], params["vec"])


def init_encoder_params(key, n_layers, dim_model, n_heads, dim_ff):
    """Stacked per-layer parameters; matmul weights bf16, small vectors packed."""
    D, F, H, L = dim_model, dim_ff, n_heads, n_layers
    Dh = D // H
    f32, bf16 = jnp.float32, jnp.bfloat16
    ks = jax.random.split(key, 6)
    s_d = 1.0 / math.sqrt(D)
    s_f = 1.0 / math.sqrt(F)

    wq = jax.random.normal(ks[0], (L, D, D), f32) * s_d
    wk = jax.random.normal(ks[1], (L, D, D), f32) * s_d
    wv = jax.random.normal(ks[2], (L, D, D), f32) * s_d
    wo = jax.random.normal(ks[3], (L, D, D), f32) * s_d
    w1 = jax.random.normal(ks[4], (L, D, F), f32) * s_d
    w2 = jax.random.normal(ks[5], (L, F, D), f32) * s_f

    # Fold the 1/sqrt(Dh) softmax scale into the Q projection (zero runtime cost).
    scale = 1.0 / math.sqrt(Dh)
    wq = wq * scale
    bq = jnp.zeros((L, D), f32) * scale
    bk = jnp.zeros((L, D), f32)
    bv = jnp.zeros((L, D), f32)

    wqkv = jnp.concatenate([wq, wk, wv], axis=-1)                 # (L, D, 3D)
    bqkv = jnp.concatenate([bq, bk, bv], axis=-1)[:, None, :]     # (L, 1, 3D)

    zeros_d = jnp.zeros((L, D), f32)
    ones_d = jnp.ones((L, D), f32)
    # packed per-layer vectors: [bo, ln1_gamma, ln1_beta, b2, ln2_gamma, ln2_beta]
    vec = jnp.stack([zeros_d, ones_d, zeros_d, zeros_d, ones_d, zeros_d], axis=1)

    return {
        "wqkv": wqkv.astype(bf16),
        "bqkv": bqkv,
        "wo": wo.astype(bf16),
        "w1": w1.astype(bf16),
        "b1": jnp.zeros((L, 1, F), f32),
        "w2": w2.astype(bf16),
        "vec": vec,
    }


def encoder_reference(x, params, n_heads):
    """Pure-JAX f32 reference of the same forward (for a sanity check)."""
    L = params["wqkv"].shape[0]
    B, S, D = x.shape
    H = n_heads
    Dh = D // H
    y = x.astype(jnp.float32)
    for l in range(L):
        wqkv = params["wqkv"][l].astype(jnp.float32)
        bqkv = params["bqkv"][l, 0]
        wo = params["wo"][l].astype(jnp.float32)
        w1 = params["w1"][l].astype(jnp.float32)
        b1 = params["b1"][l, 0]
        w2 = params["w2"][l].astype(jnp.float32)
        vec = params["vec"][l]
        bo, g1, be1, b2, g2, be2 = (vec[i] for i in range(6))

        qkv = y @ wqkv + bqkv
        q, k, v = qkv[..., :D], qkv[..., D:2 * D], qkv[..., 2 * D:]
        qh = q.reshape(B, S, H, Dh).transpose(0, 2, 1, 3)
        kh = k.reshape(B, S, H, Dh).transpose(0, 2, 1, 3)
        vh = v.reshape(B, S, H, Dh).transpose(0, 2, 1, 3)
        s = jnp.einsum('bhqe,bhke->bhqk', qh, kh)      # scale folded into wq
        p = jax.nn.softmax(s, axis=-1)
        ctx = jnp.einsum('bhqk,bhke->bhqe', p, vh)
        ctx = ctx.transpose(0, 2, 1, 3).reshape(B, S, D)
        attn = ctx @ wo + bo

        z = y + attn
        mu = jnp.mean(z, axis=-1, keepdims=True)
        var = jnp.mean((z - mu) ** 2, axis=-1, keepdims=True)
        z = (z - mu) / jnp.sqrt(var + 1e-5) * g1 + be1

        h1 = jnp.maximum(z @ w1 + b1, 0.0)
        ff = h1 @ w2 + b2
        u = z + ff
        mu2 = jnp.mean(u, axis=-1, keepdims=True)
        var2 = jnp.mean((u - mu2) ** 2, axis=-1, keepdims=True)
        y = (u - mu2) / jnp.sqrt(var2 + 1e-5) * g2 + be2
    return y


if __name__ == "__main__":
    # Small config consistent with Encoder(dim_model, n_heads, dim_ff, n_layers)
    batch, seq_len = 2, 8
    dim_model, n_heads, dim_ff, n_layers = 32, 4, 64, 2

    key = jax.random.PRNGKey(0)
    k_x, k_p = jax.random.split(key)
    x = jax.random.normal(k_x, (batch, seq_len, dim_model), jnp.float32)
    params = init_encoder_params(k_p, n_layers, dim_model, n_heads, dim_ff)

    out = encoder_forward(x, params, n_heads)
    out = jax.block_until_ready(out)

    assert out.shape == (batch, seq_len, dim_model)
    assert bool(jnp.all(jnp.isfinite(out)))

    ref = encoder_reference(x, params, n_heads)
    max_err = float(jnp.max(jnp.abs(out - ref)))
    # generous tolerance: kernel uses bf16 MXU operands + approx reciprocal
    assert max_err < 0.3, f"kernel/reference mismatch: max abs err = {max_err}"

    print("KERNEL_OK")
</pallas_src>

<mosaic_0001>
module attributes {stable_mosaic.version = 11 : i64} {
  func.func @fused_encoder_kernel(%arg0: i32, %arg1: i32, %arg2: memref<2x8x32xf32, #tpu.memory_space<vmem>>, %arg3: memref<1x32x96xbf16, #tpu.memory_space<vmem>>, %arg4: memref<1x1x96xf32, #tpu.memory_space<vmem>>, %arg5: memref<1x32x32xbf16, #tpu.memory_space<vmem>>, %arg6: memref<1x32x64xbf16, #tpu.memory_space<vmem>>, %arg7: memref<1x1x64xf32, #tpu.memory_space<vmem>>, %arg8: memref<1x64x32xbf16, #tpu.memory_space<vmem>>, %arg9: memref<1x6x32xf32, #tpu.memory_space<vmem>>, %arg10: memref<2x8x32xf32, #tpu.memory_space<vmem>>, %arg11: memref<16x32xf32, #tpu.memory_space<vmem>>) attributes {dimension_semantics = [#tpu.dimension_semantics<parallel>, #tpu.dimension_semantics<arbitrary>], iteration_bounds = array<i64: 1, 2>, scalar_prefetch = 0 : i64, scratch_operands = 1 : i64, tpu.core_type = #tpu.core_type<tc>, window_params = [{transform_indices = @transform_0, window_bounds = array<i64: 2, 8, 32>}, {transform_indices = @transform_1, window_bounds = array<i64: 1, 32, 96>}, {transform_indices = @transform_2, window_bounds = array<i64: 1, 1, 96>}, {transform_indices = @transform_3, window_bounds = array<i64: 1, 32, 32>}, {transform_indices = @transform_4, window_bounds = array<i64: 1, 32, 64>}, {transform_indices = @transform_5, window_bounds = array<i64: 1, 1, 64>}, {transform_indices = @transform_6, window_bounds = array<i64: 1, 64, 32>}, {transform_indices = @transform_7, window_bounds = array<i64: 1, 6, 32>}, {transform_indices = @transform_8, window_bounds = array<i64: 2, 8, 32>}]} {
    %c0_i32 = arith.constant 0 : i32
    %0 = arith.cmpi eq, %arg1, %c0_i32 : i32
    %1 = arith.extui %0 : i1 to i32
    %c0_i32_0 = arith.constant 0 : i32
    %2 = arith.cmpi ne, %1, %c0_i32_0 : i32
    scf.if %2 {
      %c0_88 = arith.constant 0 : index
      %c0_89 = arith.constant 0 : index
      %c0_90 = arith.constant 0 : index
      %256 = vector.load %arg2[%c0_88, %c0_89, %c0_90] : memref<2x8x32xf32, #tpu.memory_space<vmem>>, vector<2x8x32xf32>
      %c0_91 = arith.constant 0 : index
      %c0_92 = arith.constant 0 : index
      %c0_93 = arith.constant 0 : index
      %257 = vector.load %arg10[%c0_91, %c0_92, %c0_93] : memref<2x8x32xf32, #tpu.memory_space<vmem>>, vector<2x8x32xf32>
      tpu.vector_store %arg10[%c0_91, %c0_92, %c0_93], %256 {strides = array<i32>} : memref<2x8x32xf32, #tpu.memory_space<vmem>>, vector<2x8x32xf32>,
    } else {
    }
    %c0 = arith.constant 0 : index
    %c0_1 = arith.constant 0 : index
    %c0_2 = arith.constant 0 : index
    %3 = vector.load %arg10[%c0, %c0_1, %c0_2] : memref<2x8x32xf32, #tpu.memory_space<vmem>>, vector<2x8x32xf32>
    %4 = vector.shape_cast %3 : vector<2x8x32xf32> to vector<16x32xf32>
    %5 = arith.truncf %4 : vector<16x32xf32> to vector<16x32xbf16>
    %c0_3 = arith.constant 0 : index
    %c0_4 = arith.constant 0 : index
    %c0_5 = arith.constant 0 : index
    %6 = vector.load %arg3[%c0_3, %c0_4, %c0_5] : memref<1x32x96xbf16, #tpu.memory_space<vmem>>, vector<1x32x96xbf16>
    %7 = vector.shape_cast %6 : vector<1x32x96xbf16> to vector<32x96xbf16>
    %cst = arith.constant dense<0.000000e+00> : vector<16x96xf32>
    %8 = tpu.matmul %5, %7, %cst {dimension_numbers = #tpu.dot_dimension_numbers<[1], [0], [0], [1], [0, 0, 1, 1], [], []>} : vector<16x32xbf16>, vector<32x96xbf16>, vector<16x96xf32> -> vector<16x96xf32>
    %c0_6 = arith.constant 0 : index
    %c0_7 = arith.constant 0 : index
    %c0_8 = arith.constant 0 : index
    %9 = vector.load %arg4[%c0_6, %c0_7, %c0_8] : memref<1x1x96xf32, #tpu.memory_space<vmem>>, vector<1x1x96xf32>
    %10 = vector.shape_cast %9 : vector<1x1x96xf32> to vector<1x96xf32>
    %11 = vector.broadcast %10 : vector<1x96xf32> to vector<16x96xf32>
    %12 = arith.addf %8, %11 : vector<16x96xf32>
    %13 = vector.extract_strided_slice %12 {offsets = [0, 0], sizes = [8, 8], strides = [1, 1]} : vector<16x96xf32> to vector<8x8xf32>
    %14 = arith.truncf %13 : vector<8x8xf32> to vector<8x8xbf16>
    %15 = vector.extract_strided_slice %12 {offsets = [0, 32], sizes = [8, 8], strides = [1, 1]} : vector<16x96xf32> to vector<8x8xf32>
    %16 = arith.truncf %15 : vector<8x8xf32> to vector<8x8xbf16>
    %17 = vector.extract_strided_slice %12 {offsets = [0, 64], sizes = [8, 8], strides = [1, 1]} : vector<16x96xf32> to vector<8x8xf32>
    %18 = arith.truncf %17 : vector<8x8xf32> to vector<8x8xbf16>
    "tpu.trace_start"() <{level = 10 : i32, message = "qe,ke->qk"}> : () -> ()
    %cst_9 = arith.constant dense<0.000000e+00> : vector<8x8xf32>
    %19 = tpu.matmul %14, %16, %cst_9 {dimension_numbers = #tpu.dot_dimension_numbers<[1], [1], [0], [0], [0, 0, 1, 0], [], []>} : vector<8x8xbf16>, vector<8x8xbf16>, vector<8x8xf32> -> vector<8x8xf32>
    "tpu.trace_stop"() : () -> ()
    %cst_10 = arith.constant dense<0xFF800000> : vector<8xf32>
    %20 = vector.multi_reduction <maximumf>, %19, %cst_10 [1] : vector<8x8xf32> to vector<8xf32>
    %21 = vector.shape_cast %20 : vector<8xf32> to vector<8x1xf32>
    %22 = vector.broadcast %21 : vector<8x1xf32> to vector<8x8xf32>
    %23 = arith.subf %19, %22 : vector<8x8xf32>
    %24 = math.exp %23 : vector<8x8xf32>
    %cst_11 = arith.constant dense<0.000000e+00> : vector<8xf32>
    %25 = vector.multi_reduction <add>, %24, %cst_11 [1] : vector<8x8xf32> to vector<8xf32>
    %26 = vector.shape_cast %25 : vector<8xf32> to vector<8x1xf32>
    %27 = arith.truncf %24 : vector<8x8xf32> to vector<8x8xbf16>
    %cst_12 = arith.constant dense<0.000000e+00> : vector<8x8xf32>
    %28 = tpu.matmul %27, %18, %cst_12 {dimension_numbers = #tpu.dot_dimension_numbers<[1], [0], [0], [1], [0, 0, 1, 1], [], []>} : vector<8x8xbf16>, vector<8x8xbf16>, vector<8x8xf32> -> vector<8x8xf32>
    %29 = tpu.reciprocal %26 {approx = true} : vector<8x1xf32> -> vector<8x1xf32>
    %30 = vector.broadcast %29 : vector<8x1xf32> to vector<8x8xf32>
    %31 = arith.mulf %28, %30 : vector<8x8xf32>
    %c0_13 = arith.constant 0 : index
    %c0_14 = arith.constant 0 : index
    %32 = vector.load %arg11[%c0_13, %c0_14] : memref<16x32xf32, #tpu.memory_space<vmem>>, vector<8x8xf32>
    tpu.vector_store %arg11[%c0_13, %c0_14], %31 {strides = array<i32>} : memref<16x32xf32, #tpu.memory_space<vmem>>, vector<8x8xf32>,
    %33 = vector.extract_strided_slice %12 {offsets = [0, 8], sizes = [8, 8], strides = [1, 1]} : vector<16x96xf32> to vector<8x8xf32>
    %34 = arith.truncf %33 : vector<8x8xf32> to vector<8x8xbf16>
    %35 = vector.extract_strided_slice %12 {offsets = [0, 40], sizes = [8, 8], strides = [1, 1]} : vector<16x96xf32> to vector<8x8xf32>
    %36 = arith.truncf %35 : vector<8x8xf32> to vector<8x8xbf16>
    %37 = vector.extract_strided_slice %12 {offsets = [0, 72], sizes = [8, 8], strides = [1, 1]} : vector<16x96xf32> to vector<8x8xf32>
    %38 = arith.truncf %37 : vector<8x8xf32> to vector<8x8xbf16>
    "tpu.trace_start"() <{level = 10 : i32, message = "qe,ke->qk"}> : () -> ()
    %cst_15 = arith.constant dense<0.000000e+00> : vector<8x8xf32>
    %39 = tpu.matmul %34, %36, %cst_15 {dimension_numbers = #tpu.dot_dimension_numbers<[1], [1], [0], [0], [0, 0, 1, 0], [], []>} : vector<8x8xbf16>, vector<8x8xbf16>, vector<8x8xf32> -> vector<8x8xf32>
    "tpu.trace_stop"() : () -> ()
    %cst_16 = arith.constant dense<0xFF800000> : vector<8xf32>
    %40 = vector.multi_reduction <maximumf>, %39, %cst_16 [1] : vector<8x8xf32> to vector<8xf32>
    %41 = vector.shape_cast %40 : vector<8xf32> to vector<8x1xf32>
    %42 = vector.broadcast %41 : vector<8x1xf32> to vector<8x8xf32>
    %43 = arith.subf %39, %42 : vector<8x8xf32>
    %44 = math.exp %43 : vector<8x8xf32>
    %cst_17 = arith.constant dense<0.000000e+00> : vector<8xf32>
    %45 = vector.multi_reduction <add>, %44, %cst_17 [1] : vector<8x8xf32> to vector<8xf32>
    %46 = vector.shape_cast %45 : vector<8xf32> to vector<8x1xf32>
    %47 = arith.truncf %44 : vector<8x8xf32> to vector<8x8xbf16>
    %cst_18 = arith.constant dense<0.000000e+00> : vector<8x8xf32>
    %48 = tpu.matmul %47, %38, %cst_18 {dimension_numbers = #tpu.dot_dimension_numbers<[1], [0], [0], [1], [0, 0, 1, 1], [], []>} : vector<8x8xbf16>, vector<8x8xbf16>, vector<8x8xf32> -> vector<8x8xf32>
    %49 = tpu.reciprocal %46 {approx = true} : vector<8x1xf32> -> vector<8x1xf32>
    %50 = vector.broadcast %49 : vector<8x1xf32> to vector<8x8xf32>
    %51 = arith.mulf %48, %50 : vector<8x8xf32>
    %c0_19 = arith.constant 0 : index
    %c8 = arith.constant 8 : index
    %52 = vector.load %arg11[%c0_19, %c8] : memref<16x32xf32, #tpu.memory_space<vmem>>, vector<8x8xf32>
    tpu.vector_store %arg11[%c0_19, %c8], %51 {strides = array<i32>} : memref<16x32xf32, #tpu.memory_space<vmem>>, vector<8x8xf32>,
    %53 = vector.extract_strided_slice %12 {offsets = [0, 16], sizes = [8, 8], strides = [1, 1]} : vector<16x96xf32> to vector<8x8xf32>
    %54 = arith.truncf %53 : vector<8x8xf32> to vector<8x8xbf16>
    %55 = vector.extract_strided_slice %12 {offsets = [0, 48], sizes = [8, 8], strides = [1, 1]} : vector<16x96xf32> to vector<8x8xf32>
    %56 = arith.truncf %55 : vector<8x8xf32> to vector<8x8xbf16>
    %57 = vector.extract_strided_slice %12 {offsets = [0, 80], sizes = [8, 8], strides = [1, 1]} : vector<16x96xf32> to vector<8x8xf32>
    %58 = arith.truncf %57 : vector<8x8xf32> to vector<8x8xbf16>
    "tpu.trace_start"() <{level = 10 : i32, message = "qe,ke->qk"}> : () -> ()
    %cst_20 = arith.constant dense<0.000000e+00> : vector<8x8xf32>
    %59 = tpu.matmul %54, %56, %cst_20 {dimension_numbers = #tpu.dot_dimension_numbers<[1], [1], [0], [0], [0, 0, 1, 0], [], []>} : vector<8x8xbf16>, vector<8x8xbf16>, vector<8x8xf32> -> vector<8x8xf32>
    "tpu.trace_stop"() : () -> ()
    %cst_21 = arith.constant dense<0xFF800000> : vector<8xf32>
    %60 = vector.multi_reduction <maximumf>, %59, %cst_21 [1] : vector<8x8xf32> to vector<8xf32>
    %61 = vector.shape_cast %60 : vector<8xf32> to vector<8x1xf32>
    %62 = vector.broadcast %61 : vector<8x1xf32> to vector<8x8xf32>
    %63 = arith.subf %59, %62 : vector<8x8xf32>
    %64 = math.exp %63 : vector<8x8xf32>
    %cst_22 = arith.constant dense<0.000000e+00> : vector<8xf32>
    %65 = vector.multi_reduction <add>, %64, %cst_22 [1] : vector<8x8xf32> to vector<8xf32>
    %66 = vector.shape_cast %65 : vector<8xf32> to vector<8x1xf32>
    %67 = arith.truncf %64 : vector<8x8xf32> to vector<8x8xbf16>
    %cst_23 = arith.constant dense<0.000000e+00> : vector<8x8xf32>
    %68 = tpu.matmul %67, %58, %cst_23 {dimension_numbers = #tpu.dot_dimension_numbers<[1], [0], [0], [1], [0, 0, 1, 1], [], []>} : vector<8x8xbf16>, vector<8x8xbf16>, vector<8x8xf32> -> vector<8x8xf32>
    %69 = tpu.reciprocal %66 {approx = true} : vector<8x1xf32> -> vector<8x1xf32>
    %70 = vector.broadcast %69 : vector<8x1xf32> to vector<8x8xf32>
    %71 = arith.mulf %68, %70 : vector<8x8xf32>
    %c0_24 = arith.constant 0 : index
    %c16 = arith.constant 16 : index
    %72 = vector.load %arg11[%c0_24, %c16] : memref<16x32xf32, #tpu.memory_space<vmem>>, vector<8x8xf32>
    tpu.vector_store %arg11[%c0_24, %c16], %71 {strides = array<i32>} : memref<16x32xf32, #tpu.memory_space<vmem>>, vector<8x8xf32>,
    %73 = vector.extract_strided_slice %12 {offsets = [0, 24], sizes = [8, 8], strides = [1, 1]} : vector<16x96xf32> to vector<8x8xf32>
    %74 = arith.truncf %73 : vector<8x8xf32> to vector<8x8xbf16>
    %75 = vector.extract_strided_slice %12 {offsets = [0, 56], sizes = [8, 8], strides = [1, 1]} : vector<16x96xf32> to vector<8x8xf32>
    %76 = arith.truncf %75 : vector<8x8xf32> to vector<8x8xbf16>
    %77 = vector.extract_strided_slice %12 {offsets = [0, 88], sizes = [8, 8], strides = [1, 1]} : vector<16x96xf32> to vector<8x8xf32>
    %78 = arith.truncf %77 : vector<8x8xf32> to vector<8x8xbf16>
    "tpu.trace_start"() <{level = 10 : i32, message = "qe,ke->qk"}> : () -> ()
    %cst_25 = arith.constant dense<0.000000e+00> : vector<8x8xf32>
    %79 = tpu.matmul %74, %76, %cst_25 {dimension_numbers = #tpu.dot_dimension_numbers<[1], [1], [0], [0], [0, 0, 1, 0], [], []>} : vector<8x8xbf16>, vector<8x8xbf16>, vector<8x8xf32> -> vector<8x8xf32>
    "tpu.trace_stop"() : () -> ()
    %cst_26 = arith.constant dense<0xFF800000> : vector<8xf32>
    %80 = vector.multi_reduction <maximumf>, %79, %cst_26 [1] : vector<8x8xf32> to vector<8xf32>
    %81 = vector.shape_cast %80 : vector<8xf32> to vector<8x1xf32>
    %82 = vector.broadcast %81 : vector<8x1xf32> to vector<8x8xf32>
    %83 = arith.subf %79, %82 : vector<8x8xf32>
    %84 = math.exp %83 : vector<8x8xf32>
    %cst_27 = arith.constant dense<0.000000e+00> : vector<8xf32>
    %85 = vector.multi_reduction <add>, %84, %cst_27 [1] : vector<8x8xf32> to vector<8xf32>
    %86 = vector.shape_cast %85 : vector<8xf32> to vector<8x1xf32>
    %87 = arith.truncf %84 : vector<8x8xf32> to vector<8x8xbf16>
    %cst_28 = arith.constant dense<0.000000e+00> : vector<8x8xf32>
    %88 = tpu.matmul %87, %78, %cst_28 {dimension_numbers = #tpu.dot_dimension_numbers<[1], [0], [0], [1], [0, 0, 1, 1], [], []>} : vector<8x8xbf16>, vector<8x8xbf16>, vector<8x8xf32> -> vector<8x8xf32>
    %89 = tpu.reciprocal %86 {approx = true} : vector<8x1xf32> -> vector<8x1xf32>
    %90 = vector.broadcast %89 : vector<8x1xf32> to vector<8x8xf32>
    %91 = arith.mulf %88, %90 : vector<8x8xf32>
    %c0_29 = arith.constant 0 : index
    %c24 = arith.constant 24 : index
    %92 = vector.load %arg11[%c0_29, %c24] : memref<16x32xf32, #tpu.memory_space<vmem>>, vector<8x8xf32>
    tpu.vector_store %arg11[%c0_29, %c24], %91 {strides = array<i32>} : memref<16x32xf32, #tpu.memory_space<vmem>>, vector<8x8xf32>,
    %93 = vector.extract_strided_slice %12 {offsets = [8, 0], sizes = [8, 8], strides = [1, 1]} : vector<16x96xf32> to vector<8x8xf32>
    %94 = arith.truncf %93 : vector<8x8xf32> to vector<8x8xbf16>
    %95 = vector.extract_strided_slice %12 {offsets = [8, 32], sizes = [8, 8], strides = [1, 1]} : vector<16x96xf32> to vector<8x8xf32>
    %96 = arith.truncf %95 : vector<8x8xf32> to vector<8x8xbf16>
    %97 = vector.extract_strided_slice %12 {offsets = [8, 64], sizes = [8, 8], strides = [1, 1]} : vector<16x96xf32> to vector<8x8xf32>
    %98 = arith.truncf %97 : vector<8x8xf32> to vector<8x8xbf16>
    "tpu.trace_start"() <{level = 10 : i32, message = "qe,ke->qk"}> : () -> ()
    %cst_30 = arith.constant dense<0.000000e+00> : vector<8x8xf32>
    %99 = tpu.matmul %94, %96, %cst_30 {dimension_numbers = #tpu.dot_dimension_numbers<[1], [1], [0], [0], [0, 0, 1, 0], [], []>} : vector<8x8xbf16>, vector<8x8xbf16>, vector<8x8xf32> -> vector<8x8xf32>
    "tpu.trace_stop"() : () -> ()
    %cst_31 = arith.constant dense<0xFF800000> : vector<8xf32>
    %100 = vector.multi_reduction <maximumf>, %99, %cst_31 [1] : vector<8x8xf32> to vector<8xf32>
    %101 = vector.shape_cast %100 : vector<8xf32> to vector<8x1xf32>
    %102 = vector.broadcast %101 : vector<8x1xf32> to vector<8x8xf32>
    %103 = arith.subf %99, %102 : vector<8x8xf32>
    %104 = math.exp %103 : vector<8x8xf32>
    %cst_32 = arith.constant dense<0.000000e+00> : vector<8xf32>
    %105 = vector.multi_reduction <add>, %104, %cst_32 [1] : vector<8x8xf32> to vector<8xf32>
    %106 = vector.shape_cast %105 : vector<8xf32> to vector<8x1xf32>
    %107 = arith.truncf %104 : vector<8x8xf32> to vector<8x8xbf16>
    %cst_33 = arith.constant dense<0.000000e+00> : vector<8x8xf32>
    %108 = tpu.matmul %107, %98, %cst_33 {dimension_numbers = #tpu.dot_dimension_numbers<[1], [0], [0], [1], [0, 0, 1, 1], [], []>} : vector<8x8xbf16>, vector<8x8xbf16>, vector<8x8xf32> -> vector<8x8xf32>
    %109 = tpu.reciprocal %106 {approx = true} : vector<8x1xf32> -> vector<8x1xf32>
    %110 = vector.broadcast %109 : vector<8x1xf32> to vector<8x8xf32>
    %111 = arith.mulf %108, %110 : vector<8x8xf32>
    %c8_34 = arith.constant 8 : index
    %c0_35 = arith.constant 0 : index
    %112 = vector.load %arg11[%c8_34, %c0_35] : memref<16x32xf32, #tpu.memory_space<vmem>>, vector<8x8xf32>
    tpu.vector_store %arg11[%c8_34, %c0_35], %111 {strides = array<i32>} : memref<16x32xf32, #tpu.memory_space<vmem>>, vector<8x8xf32>,
    %113 = vector.extract_strided_slice %12 {offsets = [8, 8], sizes = [8, 8], strides = [1, 1]} : vector<16x96xf32> to vector<8x8xf32>
    %114 = arith.truncf %113 : vector<8x8xf32> to vector<8x8xbf16>
    %115 = vector.extract_strided_slice %12 {offsets = [8, 40], sizes = [8, 8], strides = [1, 1]} : vector<16x96xf32> to vector<8x8xf32>
    %116 = arith.truncf %115 : vector<8x8xf32> to vector<8x8xbf16>
    %117 = vector.extract_strided_slice %12 {offsets = [8, 72], sizes = [8, 8], strides = [1, 1]} : vector<16x96xf32> to vector<8x8xf32>
    %118 = arith.truncf %117 : vector<8x8xf32> to vector<8x8xbf16>
    "tpu.trace_start"() <{level = 10 : i32, message = "qe,ke->qk"}> : () -> ()
    %cst_36 = arith.constant dense<0.000000e+00> : vector<8x8xf32>
    %119 = tpu.matmul %114, %116, %cst_36 {dimension_numbers = #tpu.dot_dimension_numbers<[1], [1], [0], [0], [0, 0, 1, 0], [], []>} : vector<8x8xbf16>, vector<8x8xbf16>, vector<8x8xf32> -> vector<8x8xf32>
    "tpu.trace_stop"() : () -> ()
    %cst_37 = arith.constant dense<0xFF800000> : vector<8xf32>
    %120 = vector.multi_reduction <maximumf>, %119, %cst_37 [1] : vector<8x8xf32> to vector<8xf32>
    %121 = vector.shape_cast %120 : vector<8xf32> to vector<8x1xf32>
    %122 = vector.broadcast %121 : vector<8x1xf32> to vector<8x8xf32>
    %123 = arith.subf %119, %122 : vector<8x8xf32>
    %124 = math.exp %123 : vector<8x8xf32>
    %cst_38 = arith.constant dense<0.000000e+00> : vector<8xf32>
    %125 = vector.multi_reduction <add>, %124, %cst_38 [1] : vector<8x8xf32> to vector<8xf32>
    %126 = vector.shape_cast %125 : vector<8xf32> to vector<8x1xf32>
    %127 = arith.truncf %124 : vector<8x8xf32> to vector<8x8xbf16>
    %cst_39 = arith.constant dense<0.000000e+00> : vector<8x8xf32>
    %128 = tpu.matmul %127, %118, %cst_39 {dimension_numbers = #tpu.dot_dimension_numbers<[1], [0], [0], [1], [0, 0, 1, 1], [], []>} : vector<8x8xbf16>, vector<8x8xbf16>, vector<8x8xf32> -> vector<8x8xf32>
    %129 = tpu.reciprocal %126 {approx = true} : vector<8x1xf32> -> vector<8x1xf32>
    %130 = vector.broadcast %129 : vector<8x1xf32> to vector<8x8xf32>
    %131 = arith.mulf %128, %130 : vector<8x8xf32>
    %c8_40 = arith.constant 8 : index
    %c8_41 = arith.constant 8 : index
    %132 = vector.load %arg11[%c8_40, %c8_41] : memref<16x32xf32, #tpu.memory_space<vmem>>, vector<8x8xf32>
    tpu.vector_store %arg11[%c8_40, %c8_41], %131 {strides = array<i32>} : memref<16x32xf32, #tpu.memory_space<vmem>>, vector<8x8xf32>,
    %133 = vector.extract_strided_slice %12 {offsets = [8, 16], sizes = [8, 8], strides = [1, 1]} : vector<16x96xf32> to vector<8x8xf32>
    %134 = arith.truncf %133 : vector<8x8xf32> to vector<8x8xbf16>
    %135 = vector.extract_strided_slice %12 {offsets = [8, 48], sizes = [8, 8], strides = [1, 1]} : vector<16x96xf32> to vector<8x8xf32>
    %136 = arith.truncf %135 : vector<8x8xf32> to vector<8x8xbf16>
    %137 = vector.extract_strided_slice %12 {offsets = [8, 80], sizes = [8, 8], strides = [1, 1]} : vector<16x96xf32> to vector<8x8xf32>
    %138 = arith.truncf %137 : vector<8x8xf32> to vector<8x8xbf16>
    "tpu.trace_start"() <{level = 10 : i32, message = "qe,ke->qk"}> : () -> ()
    %cst_42 = arith.constant dense<0.000000e+00> : vector<8x8xf32>
    %139 = tpu.matmul %134, %136, %cst_42 {dimension_numbers = #tpu.dot_dimension_numbers<[1], [1], [0], [0], [0, 0, 1, 0], [], []>} : vector<8x8xbf16>, vector<8x8xbf16>, vector<8x8xf32> -> vector<8x8xf32>
    "tpu.trace_stop"() : () -> ()
    %cst_43 = arith.constant dense<0xFF800000> : vector<8xf32>
    %140 = vector.multi_reduction <maximumf>, %139, %cst_43 [1] : vector<8x8xf32> to vector<8xf32>
    %141 = vector.shape_cast %140 : vector<8xf32> to vector<8x1xf32>
    %142 = vector.broadcast %141 : vector<8x1xf32> to vector<8x8xf32>
    %143 = arith.subf %139, %142 : vector<8x8xf32>
    %144 = math.exp %143 : vector<8x8xf32>
    %cst_44 = arith.constant dense<0.000000e+00> : vector<8xf32>
    %145 = vector.multi_reduction <add>, %144, %cst_44 [1] : vector<8x8xf32> to vector<8xf32>
    %146 = vector.shape_cast %145 : vector<8xf32> to vector<8x1xf32>
    %147 = arith.truncf %144 : vector<8x8xf32> to vector<8x8xbf16>
    %cst_45 = arith.constant dense<0.000000e+00> : vector<8x8xf32>
    %148 = tpu.matmul %147, %138, %cst_45 {dimension_numbers = #tpu.dot_dimension_numbers<[1], [0], [0], [1], [0, 0, 1, 1], [], []>} : vector<8x8xbf16>, vector<8x8xbf16>, vector<8x8xf32> -> vector<8x8xf32>
    %149 = tpu.reciprocal %146 {approx = true} : vector<8x1xf32> -> vector<8x1xf32>
    %150 = vector.broadcast %149 : vector<8x1xf32> to vector<8x8xf32>
    %151 = arith.mulf %148, %150 : vector<8x8xf32>
    %c8_46 = arith.constant 8 : index
    %c16_47 = arith.constant 16 : index
    %152 = vector.load %arg11[%c8_46, %c16_47] : memref<16x32xf32, #tpu.memory_space<vmem>>, vector<8x8xf32>
    tpu.vector_store %arg11[%c8_46, %c16_47], %151 {strides = array<i32>} : memref<16x32xf32, #tpu.memory_space<vmem>>, vector<8x8xf32>,
    %153 = vector.extract_strided_slice %12 {offsets = [8, 24], sizes = [8, 8], strides = [1, 1]} : vector<16x96xf32> to vector<8x8xf32>
    %154 = arith.truncf %153 : vector<8x8xf32> to vector<8x8xbf16>
    %155 = vector.extract_strided_slice %12 {offsets = [8, 56], sizes = [8, 8], strides = [1, 1]} : vector<16x96xf32> to vector<8x8xf32>
    %156 = arith.truncf %155 : vector<8x8xf32> to vector<8x8xbf16>
    %157 = vector.extract_strided_slice %12 {offsets = [8, 88], sizes = [8, 8], strides = [1, 1]} : vector<16x96xf32> to vector<8x8xf32>
    %158 = arith.truncf %157 : vector<8x8xf32> to vector<8x8xbf16>
    "tpu.trace_start"() <{level = 10 : i32, message = "qe,ke->qk"}> : () -> ()
    %cst_48 = arith.constant dense<0.000000e+00> : vector<8x8xf32>
    %159 = tpu.matmul %154, %156, %cst_48 {dimension_numbers = #tpu.dot_dimension_numbers<[1], [1], [0], [0], [0, 0, 1, 0], [], []>} : vector<8x8xbf16>, vector<8x8xbf16>, vector<8x8xf32> -> vector<8x8xf32>
    "tpu.trace_stop"() : () -> ()
    %cst_49 = arith.constant dense<0xFF800000> : vector<8xf32>
    %160 = vector.multi_reduction <maximumf>, %159, %cst_49 [1] : vector<8x8xf32> to vector<8xf32>
    %161 = vector.shape_cast %160 : vector<8xf32> to vector<8x1xf32>
    %162 = vector.broadcast %161 : vector<8x1xf32> to vector<8x8xf32>
    %163 = arith.subf %159, %162 : vector<8x8xf32>
    %164 = math.exp %163 : vector<8x8xf32>
    %cst_50 = arith.constant dense<0.000000e+00> : vector<8xf32>
    %165 = vector.multi_reduction <add>, %164, %cst_50 [1] : vector<8x8xf32> to vector<8xf32>
    %166 = vector.shape_cast %165 : vector<8xf32> to vector<8x1xf32>
    %167 = arith.truncf %164 : vector<8x8xf32> to vector<8x8xbf16>
    %cst_51 = arith.constant dense<0.000000e+00> : vector<8x8xf32>
    %168 = tpu.matmul %167, %158, %cst_51 {dimension_numbers = #tpu.dot_dimension_numbers<[1], [0], [0], [1], [0, 0, 1, 1], [], []>} : vector<8x8xbf16>, vector<8x8xbf16>, vector<8x8xf32> -> vector<8x8xf32>
    %169 = tpu.reciprocal %166 {approx = true} : vector<8x1xf32> -> vector<8x1xf32>
    %170 = vector.broadcast %169 : vector<8x1xf32> to vector<8x8xf32>
    %171 = arith.mulf %168, %170 : vector<8x8xf32>
    %c8_52 = arith.constant 8 : index
    %c24_53 = arith.constant 24 : index
    %172 = vector.load %arg11[%c8_52, %c24_53] : memref<16x32xf32, #tpu.memory_space<vmem>>, vector<8x8xf32>
    tpu.vector_store %arg11[%c8_52, %c24_53], %171 {strides = array<i32>} : memref<16x32xf32, #tpu.memory_space<vmem>>, vector<8x8xf32>,
    %c0_54 = arith.constant 0 : index
    %c0_55 = arith.constant 0 : index
    %c0_56 = arith.constant 0 : index
    %173 = vector.load %arg9[%c0_54, %c0_55, %c0_56] : memref<1x6x32xf32, #tpu.memory_space<vmem>>, vector<1x6x32xf32>
    %174 = vector.shape_cast %173 : vector<1x6x32xf32> to vector<6x32xf32>
    %c0_57 = arith.constant 0 : index
    %c0_58 = arith.constant 0 : index
    %175 = vector.load %arg11[%c0_57, %c0_58] : memref<16x32xf32, #tpu.memory_space<vmem>>, vector<16x32xf32>
    %176 = arith.truncf %175 : vector<16x32xf32> to vector<16x32xbf16>
    %c0_59 = arith.constant 0 : index
    %c0_60 = arith.constant 0 : index
    %c0_61 = arith.constant 0 : index
    %177 = vector.load %arg5[%c0_59, %c0_60, %c0_61] : memref<1x32x32xbf16, #tpu.memory_space<vmem>>, vector<1x32x32xbf16>
    %178 = vector.shape_cast %177 : vector<1x32x32xbf16> to vector<32x32xbf16>
    %cst_62 = arith.constant dense<0.000000e+00> : vector<16x32xf32>
    %179 = tpu.matmul %176, %178, %cst_62 {dimension_numbers = #tpu.dot_dimension_numbers<[1], [0], [0], [1], [0, 0, 1, 1], [], []>} : vector<16x32xbf16>, vector<32x32xbf16>, vector<16x32xf32> -> vector<16x32xf32>
    %180 = vector.extract_strided_slice %174 {offsets = [0, 0], sizes = [1, 32], strides = [1, 1]} : vector<6x32xf32> to vector<1x32xf32>
    %181 = vector.broadcast %180 : vector<1x32xf32> to vector<16x32xf32>
    %182 = arith.addf %179, %181 : vector<16x32xf32>
    %183 = arith.addf %4, %182 : vector<16x32xf32>
    %cst_63 = arith.constant dense<0.000000e+00> : vector<16xf32>
    %184 = vector.multi_reduction <add>, %183, %cst_63 [1] : vector<16x32xf32> to vector<16xf32>
    %185 = vector.shape_cast %184 : vector<16xf32> to vector<16x1xf32>
    %cst_64 = arith.constant 3.200000e+01 : f32
    %186 = vector.broadcast %cst_64 : f32 to vector<16x1xf32>
    %187 = arith.divf %185, %186 : vector<16x1xf32>
    %188 = vector.broadcast %187 : vector<16x1xf32> to vector<16x32xf32>
    %189 = arith.subf %183, %188 : vector<16x32xf32>
    %190 = vector.broadcast %187 : vector<16x1xf32> to vector<16x32xf32>
    %191 = arith.subf %183, %190 : vector<16x32xf32>
    %192 = arith.mulf %189, %191 : vector<16x32xf32>
    %cst_65 = arith.constant dense<0.000000e+00> : vector<16xf32>
    %193 = vector.multi_reduction <add>, %192, %cst_65 [1] : vector<16x32xf32> to vector<16xf32>
    %194 = vector.shape_cast %193 : vector<16xf32> to vector<16x1xf32>
    %cst_66 = arith.constant 3.200000e+01 : f32
    %195 = vector.broadcast %cst_66 : f32 to vector<16x1xf32>
    %196 = arith.divf %194, %195 : vector<16x1xf32>
    %197 = vector.broadcast %187 : vector<16x1xf32> to vector<16x32xf32>
    %198 = arith.subf %183, %197 : vector<16x32xf32>
    %cst_67 = arith.constant 9.99999974E-6 : f32
    %199 = vector.broadcast %cst_67 : f32 to vector<16x1xf32>
    %200 = arith.addf %196, %199 : vector<16x1xf32>
    %201 = math.rsqrt %200 : vector<16x1xf32>
    %202 = vector.broadcast %201 : vector<16x1xf32> to vector<16x32xf32>
    %203 = arith.mulf %198, %202 : vector<16x32xf32>
    %204 = vector.extract_strided_slice %174 {offsets = [1, 0], sizes = [1, 32], strides = [1, 1]} : vector<6x32xf32> to vector<1x32xf32>
    %205 = vector.broadcast %204 : vector<1x32xf32> to vector<16x32xf32>
    %206 = arith.mulf %203, %205 : vector<16x32xf32>
    %207 = vector.extract_strided_slice %174 {offsets = [2, 0], sizes = [1, 32], strides = [1, 1]} : vector<6x32xf32> to vector<1x32xf32>
    %208 = vector.broadcast %207 : vector<1x32xf32> to vector<16x32xf32>
    %209 = arith.addf %206, %208 : vector<16x32xf32>
    %210 = arith.truncf %209 : vector<16x32xf32> to vector<16x32xbf16>
    %c0_68 = arith.constant 0 : index
    %c0_69 = arith.constant 0 : index
    %c0_70 = arith.constant 0 : index
    %211 = vector.load %arg6[%c0_68, %c0_69, %c0_70] : memref<1x32x64xbf16, #tpu.memory_space<vmem>>, vector<1x32x64xbf16>
    %212 = vector.shape_cast %211 : vector<1x32x64xbf16> to vector<32x64xbf16>
    %cst_71 = arith.constant dense<0.000000e+00> : vector<16x64xf32>
    %213 = tpu.matmul %210, %212, %cst_71 {dimension_numbers = #tpu.dot_dimension_numbers<[1], [0], [0], [1], [0, 0, 1, 1], [], []>} : vector<16x32xbf16>, vector<32x64xbf16>, vector<16x64xf32> -> vector<16x64xf32>
    %c0_72 = arith.constant 0 : index
    %c0_73 = arith.constant 0 : index
    %c0_74 = arith.constant 0 : index
    %214 = vector.load %arg7[%c0_72, %c0_73, %c0_74] : memref<1x1x64xf32, #tpu.memory_space<vmem>>, vector<1x1x64xf32>
    %215 = vector.shape_cast %214 : vector<1x1x64xf32> to vector<1x64xf32>
    %216 = vector.broadcast %215 : vector<1x64xf32> to vector<16x64xf32>
    %217 = arith.addf %213, %216 : vector<16x64xf32>
    %cst_75 = arith.constant 0.000000e+00 : f32
    %218 = vector.broadcast %cst_75 : f32 to vector<16x64xf32>
    %219 = arith.maximumf %217, %218 : vector<16x64xf32>
    %220 = arith.truncf %219 : vector<16x64xf32> to vector<16x64xbf16>
    %c0_76 = arith.constant 0 : index
    %c0_77 = arith.constant 0 : index
    %c0_78 = arith.constant 0 : index
    %221 = vector.load %arg8[%c0_76, %c0_77, %c0_78] : memref<1x64x32xbf16, #tpu.memory_space<vmem>>, vector<1x64x32xbf16>
    %222 = vector.shape_cast %221 : vector<1x64x32xbf16> to vector<64x32xbf16>
    %cst_79 = arith.constant dense<0.000000e+00> : vector<16x32xf32>
    %223 = tpu.matmul %220, %222, %cst_79 {dimension_numbers = #tpu.dot_dimension_numbers<[1], [0], [0], [1], [0, 0, 1, 1], [], []>} : vector<16x64xbf16>, vector<64x32xbf16>, vector<16x32xf32> -> vector<16x32xf32>
    %224 = vector.extract_strided_slice %174 {offsets = [3, 0], sizes = [1, 32], strides = [1, 1]} : vector<6x32xf32> to vector<1x32xf32>
    %225 = vector.broadcast %224 : vector<1x32xf32> to vector<16x32xf32>
    %226 = arith.addf %223, %225 : vector<16x32xf32>
    %227 = arith.addf %209, %226 : vector<16x32xf32>
    %cst_80 = arith.constant dense<0.000000e+00> : vector<16xf32>
    %228 = vector.multi_reduction <add>, %227, %cst_80 [1] : vector<16x32xf32> to vector<16xf32>
    %229 = vector.shape_cast %228 : vector<16xf32> to vector<16x1xf32>
    %cst_81 = arith.constant 3.200000e+01 : f32
    %230 = vector.broadcast %cst_81 : f32 to vector<16x1xf32>
    %231 = arith.divf %229, %230 : vector<16x1xf32>
    %232 = vector.broadcast %231 : vector<16x1xf32> to vector<16x32xf32>
    %233 = arith.subf %227, %232 : vector<16x32xf32>
    %234 = vector.broadcast %231 : vector<16x1xf32> to vector<16x32xf32>
    %235 = arith.subf %227, %234 : vector<16x32xf32>
    %236 = arith.mulf %233, %235 : vector<16x32xf32>
    %cst_82 = arith.constant dense<0.000000e+00> : vector<16xf32>
    %237 = vector.multi_reduction <add>, %236, %cst_82 [1] : vector<16x32xf32> to vector<16xf32>
    %238 = vector.shape_cast %237 : vector<16xf32> to vector<16x1xf32>
    %cst_83 = arith.constant 3.200000e+01 : f32
    %239 = vector.broadcast %cst_83 : f32 to vector<16x1xf32>
    %240 = arith.divf %238, %239 : vector<16x1xf32>
    %241 = vector.broadcast %231 : vector<16x1xf32> to vector<16x32xf32>
    %242 = arith.subf %227, %241 : vector<16x32xf32>
    %cst_84 = arith.constant 9.99999974E-6 : f32
    %243 = vector.broadcast %cst_84 : f32 to vector<16x1xf32>
    %244 = arith.addf %240, %243 : vector<16x1xf32>
    %245 = math.rsqrt %244 : vector<16x1xf32>
    %246 = vector.broadcast %245 : vector<16x1xf32> to vector<16x32xf32>
    %247 = arith.mulf %242, %246 : vector<16x32xf32>
    %248 = vector.extract_strided_slice %174 {offsets = [4, 0], sizes = [1, 32], strides = [1, 1]} : vector<6x32xf32> to vector<1x32xf32>
    %249 = vector.broadcast %248 : vector<1x32xf32> to vector<16x32xf32>
    %250 = arith.mulf %247, %249 : vector<16x32xf32>
    %251 = vector.extract_strided_slice %174 {offsets = [5, 0], sizes = [1, 32], strides = [1, 1]} : vector<6x32xf32> to vector<1x32xf32>
    %252 = vector.broadcast %251 : vector<1x32xf32> to vector<16x32xf32>
    %253 = arith.addf %250, %252 : vector<16x32xf32>
    %254 = vector.shape_cast %253 : vector<16x32xf32> to vector<2x8x32xf32>
    %c0_85 = arith.constant 0 : index
    %c0_86 = arith.constant 0 : index
    %c0_87 = arith.constant 0 : index
    %255 = vector.load %arg10[%c0_85, %c0_86, %c0_87] : memref<2x8x32xf32, #tpu.memory_space<vmem>>, vector<2x8x32xf32>
    tpu.vector_store %arg10[%c0_85, %c0_86, %c0_87], %254 {strides = array<i32>} : memref<2x8x32xf32, #tpu.memory_space<vmem>>, vector<2x8x32xf32>,
    return
  }
  func.func @transform_0(%arg0: i32, %arg1: i32) -> (i32, i32, i32) {
    %c0_i32 = arith.constant 0 : i32
    %c0_i32_0 = arith.constant 0 : i32
    %c0_i32_1 = arith.constant 0 : i32
    return %arg0, %c0_i32, %c0_i32_0 : i32, i32, i32
  }
  func.func @transform_1(%arg0: i32, %arg1: i32) -> (i32, i32, i32) {
    %c0_i32 = arith.constant 0 : i32
    %c0_i32_0 = arith.constant 0 : i32
    %c0_i32_1 = arith.constant 0 : i32
    return %arg1, %c0_i32, %c0_i32_0 : i32, i32, i32
  }
  func.func @transform_2(%arg0: i32, %arg1: i32) -> (i32, i32, i32) {
    %c0_i32 = arith.constant 0 : i32
    %c0_i32_0 = arith.constant 0 : i32
    %c0_i32_1 = arith.constant 0 : i32
    return %arg1, %c0_i32, %c0_i32_0 : i32, i32, i32
  }
  func.func @transform_3(%arg0: i32, %arg1: i32) -> (i32, i32, i32) {
    %c0_i32 = arith.constant 0 : i32
    %c0_i32_0 = arith.constant 0 : i32
    %c0_i32_1 = arith.constant 0 : i32
    return %arg1, %c0_i32, %c0_i32_0 : i32, i32, i32
  }
  func.func @transform_4(%arg0: i32, %arg1: i32) -> (i32, i32, i32) {
    %c0_i32 = arith.constant 0 : i32
    %c0_i32_0 = arith.constant 0 : i32
    %c0_i32_1 = arith.constant 0 : i32
    return %arg1, %c0_i32, %c0_i32_0 : i32, i32, i32
  }
  func.func @transform_5(%arg0: i32, %arg1: i32) -> (i32, i32, i32) {
    %c0_i32 = arith.constant 0 : i32
    %c0_i32_0 = arith.constant 0 : i32
    %c0_i32_1 = arith.constant 0 : i32
    return %arg1, %c0_i32, %c0_i32_0 : i32, i32, i32
  }
  func.func @transform_6(%arg0: i32, %arg1: i32) -> (i32, i32, i32) {
    %c0_i32 = arith.constant 0 : i32
    %c0_i32_0 = arith.constant 0 : i32
    %c0_i32_1 = arith.constant 0 : i32
    return %arg1, %c0_i32, %c0_i32_0 : i32, i32, i32
  }
  func.func @transform_7(%arg0: i32, %arg1: i32) -> (i32, i32, i32) {
    %c0_i32 = arith.constant 0 : i32
    %c0_i32_0 = arith.constant 0 : i32
    %c0_i32_1 = arith.constant 0 : i32
    return %arg1, %c0_i32, %c0_i32_0 : i32, i32, i32
  }
  func.func @transform_8(%arg0: i32, %arg1: i32) -> (i32, i32, i32) {
    %c0_i32 = arith.constant 0 : i32
    %c0_i32_0 = arith.constant 0 : i32
    %c0_i32_1 = arith.constant 0 : i32
    return %arg0, %c0_i32, %c0_i32_0 : i32, i32, i32
  }
}

</mosaic_0001>

<llo_original>
// kernel: tpu_custom_call.1
$region0: #{tpu_custom_call.1}
  #allocation0 [shape = 'u32[]', space=smem, size = 0x4, offset = 0x4, fixed_abs, tag = 'smem constant byte address 0x4 - core index']
  #allocation1 [shape = 'u32[144,128]{1,0:T(1,128)}', space=vmem, size = 0x12000, scoped, tag = 'internal scratch']
  #allocation2 [shape = 'f32[16,32]{1,0:T(8,128)}', space=vmem, size = 0x2000, scoped, tag = 'scratch operand']
  %s0 = inlined_call_operand.hbm [shape: f32[2,8,32], index: 0, kind: input, shape index: {}]
  %s1 = inlined_call_operand.vmem [shape: bf16[2,32,96], index: 1, kind: input, shape index: {}]
  %s2 = inlined_call_operand.vmem [shape: f32[2,1,96], index: 2, kind: input, shape index: {}]
  %s3 = inlined_call_operand.vmem [shape: bf16[2,32,32], index: 3, kind: input, shape index: {}]
  %s4 = inlined_call_operand.vmem [shape: bf16[2,32,64], index: 4, kind: input, shape index: {}]
  %s5 = inlined_call_operand.vmem [shape: f32[2,1,64], index: 5, kind: input, shape index: {}]
  %s6 = inlined_call_operand.vmem [shape: bf16[2,64,32], index: 6, kind: input, shape index: {}]
  %s7 = inlined_call_operand.vmem [shape: f32[2,6,32], index: 7, kind: input, shape index: {}]
  %s8 = inlined_call_operand.hbm [shape: f32[2,8,32], index: 8, kind: output, shape index: {}]
  %s9 = sld [smem:[#allocation0]]
  $region73: #{tpu_custom_call.1} parent=0
    _
  %s11 = ssub.s32 1, %s9
  %s12 = scalar_select 0, %s11, %s9
  $region1: #{tpu_custom_call.1} parent=0
    #allocation3 [shape = 'u8[8192]{0}', space=vmem, size = 0x2000, scoped, tag = 'input window, operand 0, single buffered']
    #allocation4 [shape = 's32[2]{0}', space=sflag, size = 0x8, scoped, tag = 'scoped memory for tpu_custom_call.1']
    #allocation5 [shape = 's32[2]{0}', space=sflag, size = 0x8, scoped, tag = 'scoped memory for tpu_custom_call.1']
    #allocation6 [shape = 'u8[8192]{0}', space=vmem, size = 0x2000, scoped, tag = 'output window, operand 0, single buffered']
    %13 = vsyncpa [#allocation4], 0
    %14 = vsyncpa [#allocation5], 0
    loop: start=0, step=1, limit=4
    $region2: #{tpu_custom_call.1} parent=1 // loop_pre_header
      _
    $region3: #{tpu_custom_call.1} parent=1 // loop_header
      %s16 = sphi 0, %s20
      %p17 = scmp.ge.s32.totalorder %s16, 4
      %s23 = sphi 0, %s35
      %s24 = sphi 0, %s31
      %s25 = sphi 0, %s23
      %s26 = sphi 0, %s24
      %s27 = sphi 0, %s25
      %s28 = sphi 0, %s26
      %s38 = sphi 0, %s40
      %s41 = sphi 0, %s38
      %s42 = sphi 0, %s41
      %s58 = sphi 0, %s42
      %s64 = sphi 0, %s66
      %s67 = sphi 0, %s64
      %s68 = sphi 0, %s67
      %s84 = sphi 0, %s68
      %s90 = sphi 0, %s92
      %s93 = sphi 0, %s90
      %s94 = sphi 0, %s93
      %s110 = sphi 0, %s94
      %s116 = sphi 0, %s118
      %s119 = sphi 0, %s116
      %s120 = sphi 0, %s119
      %s136 = sphi 0, %s120
      %s142 = sphi 0, %s144
      %s145 = sphi 0, %s142
      %s146 = sphi 0, %s145
      %s162 = sphi 0, %s146
      %s168 = sphi 0, %s170
      %s171 = sphi 0, %s168
      %s172 = sphi 0, %s171
      %s188 = sphi 0, %s172
      %s194 = sphi 0, %s196
      %s197 = sphi 0, %s194
      %s198 = sphi 0, %s197
      %s214 = sphi 0, %s198
      %s220 = sphi 0, %s222
      %s223 = sphi 0, %s220
      %s224 = sphi 0, %s223
      %s240 = sphi 0, %s224
      %s246 = sphi 0, %s248
      %s249 = sphi 0, %s246
      %s250 = sphi 0, %s249
      %s266 = sphi 0, %s250
    $region4: #{tpu_custom_call.1} parent=1 // loop_header_branch
      %19 = sbr.rel (%p17) target = $region8
    $region5: #{tpu_custom_call.1} parent=1 // loop_body
      %s21 = ssub.s32 %s16, 1
      %s22 = ssub.s32 %s16, 2
      %s29 = sadd.s32 1, %s24
      %p30 = scmp.ge.s32.totalorder %s29, 2
      %s31 = scalar_select %p30, 0, %s29
      %s32 = sadd.s32 1, %s23
      %s33 = scalar_select %p30, %s32, %s23
      %p34 = scmp.ge.s32.totalorder %s33, 1
      %s35 = scalar_select %p34, 0, %s33
      %s36 = ssub.s32 %s23, %s35
      %p37 = scmp.eq.s32.totalorder %s36, 0
      %s39 = sadd.s32 %s38, 1
      %s40 = scalar_select %p37, %s38, %s39
      %p43 = pneg %p37
      %p44 = scmp.eq.s32.totalorder %s16, 1
      %p45 = por %p43, %p44
      %p46 = scmp.ne.s32.totalorder %s38, %s41
      %p47 = scmp.eq.s32.totalorder %s16, 0
      %p48 = por %p46, %p47
      %p49 = scmp.ne.s32.totalorder %s38, %s41
      %p50 = scmp.eq.s32.totalorder %s21, 1
      %p51 = por %p49, %p50
      %p52 = scmp.ne.s32.totalorder %s41, %s42
      %p53 = scmp.eq.s32.totalorder %s21, 0
      %p54 = por %p52, %p53
      %p55 = scmp.ne.s32.totalorder %s41, %s42
      %p56 = scmp.eq.s32.totalorder %s22, 1
      %p57 = por %p55, %p56
      %p59 = scmp.ne.s32.totalorder %s42, %s58
      %p60 = scmp.eq.s32.totalorder %s22, 0
      %p61 = por %p59, %p60
      %s62 = ssub.s32 %s24, %s31
      %p63 = scmp.eq.s32.totalorder %s62, 0
      %s65 = sadd.s32 %s64, 1
      %s66 = scalar_select %p63, %s64, %s65
      %p69 = pneg %p63
      %p70 = scmp.eq.s32.totalorder %s16, 1
      %p71 = por %p69, %p70
      %p72 = scmp.ne.s32.totalorder %s64, %s67
      %p73 = scmp.eq.s32.totalorder %s16, 0
      %p74 = por %p72, %p73
      %p75 = scmp.ne.s32.totalorder %s64, %s67
      %p76 = scmp.eq.s32.totalorder %s21, 1
      %p77 = por %p75, %p76
      %p78 = scmp.ne.s32.totalorder %s67, %s68
      %p79 = scmp.eq.s32.totalorder %s21, 0
      %p80 = por %p78, %p79
      %p81 = scmp.ne.s32.totalorder %s67, %s68
      %p82 = scmp.eq.s32.totalorder %s22, 1
      %p83 = por %p81, %p82
      %p85 = scmp.ne.s32.totalorder %s68, %s84
      %p86 = scmp.eq.s32.totalorder %s22, 0
      %p87 = por %p85, %p86
      %s88 = ssub.s32 %s24, %s31
      %p89 = scmp.eq.s32.totalorder %s88, 0
      %s91 = sadd.s32 %s90, 1
      %s92 = scalar_select %p89, %s90, %s91
      %p95 = pneg %p89
      %p96 = scmp.eq.s32.totalorder %s16, 1
      %p97 = por %p95, %p96
      %p98 = scmp.ne.s32.totalorder %s90, %s93
      %p99 = scmp.eq.s32.totalorder %s16, 0
      %p100 = por %p98, %p99
      %p101 = scmp.ne.s32.totalorder %s90, %s93
      %p102 = scmp.eq.s32.totalorder %s21, 1
      %p103 = por %p101, %p102
      %p104 = scmp.ne.s32.totalorder %s93, %s94
      %p105 = scmp.eq.s32.totalorder %s21, 0
      %p106 = por %p104, %p105
      %p107 = scmp.ne.s32.totalorder %s93, %s94
      %p108 = scmp.eq.s32.totalorder %s22, 1
      %p109 = por %p107, %p108
      %p111 = scmp.ne.s32.totalorder %s94, %s110
      %p112 = scmp.eq.s32.totalorder %s22, 0
      %p113 = por %p111, %p112
      %s114 = ssub.s32 %s24, %s31
      %p115 = scmp.eq.s32.totalorder %s114, 0
      %s117 = sadd.s32 %s116, 1
      %s118 = scalar_select %p115, %s116, %s117
      %p121 = pneg %p115
      %p122 = scmp.eq.s32.totalorder %s16, 1
      %p123 = por %p121, %p122
      %p124 = scmp.ne.s32.totalorder %s116, %s119
      %p125 = scmp.eq.s32.totalorder %s16, 0
      %p126 = por %p124, %p125
      %p127 = scmp.ne.s32.totalorder %s116, %s119
      %p128 = scmp.eq.s32.totalorder %s21, 1
      %p129 = por %p127, %p128
      %p130 = scmp.ne.s32.totalorder %s119, %s120
      %p131 = scmp.eq.s32.totalorder %s21, 0
      %p132 = por %p130, %p131
      %p133 = scmp.ne.s32.totalorder %s119, %s120
      %p134 = scmp.eq.s32.totalorder %s22, 1
      %p135 = por %p133, %p134
      %p137 = scmp.ne.s32.totalorder %s120, %s136
      %p138 = scmp.eq.s32.totalorder %s22, 0
      %p139 = por %p137, %p138
      %s140 = ssub.s32 %s24, %s31
      %p141 = scmp.eq.s32.totalorder %s140, 0
      %s143 = sadd.s32 %s142, 1
      %s144 = scalar_select %p141, %s142, %s143
      %p147 = pneg %p141
      %p148 = scmp.eq.s32.totalorder %s16, 1
      %p149 = por %p147, %p148
      %p150 = scmp.ne.s32.totalorder %s142, %s145
      %p151 = scmp.eq.s32.totalorder %s16, 0
      %p152 = por %p150, %p151
      %p153 = scmp.ne.s32.totalorder %s142, %s145
      %p154 = scmp.eq.s32.totalorder %s21, 1
      %p155 = por %p153, %p154
      %p156 = scmp.ne.s32.totalorder %s145, %s146
      %p157 = scmp.eq.s32.totalorder %s21, 0
      %p158 = por %p156, %p157
      %p159 = scmp.ne.s32.totalorder %s145, %s146
      %p160 = scmp.eq.s32.totalorder %s22, 1
      %p161 = por %p159, %p160
      %p163 = scmp.ne.s32.totalorder %s146, %s162
      %p164 = scmp.eq.s32.totalorder %s22, 0
      %p165 = por %p163, %p164
      %s166 = ssub.s32 %s24, %s31
      %p167 = scmp.eq.s32.totalorder %s166, 0
      %s169 = sadd.s32 %s168, 1
      %s170 = scalar_select %p167, %s168, %s169
      %p173 = pneg %p167
      %p174 = scmp.eq.s32.totalorder %s16, 1
      %p175 = por %p173, %p174
      %p176 = scmp.ne.s32.totalorder %s168, %s171
      %p177 = scmp.eq.s32.totalorder %s16, 0
      %p178 = por %p176, %p177
      %p179 = scmp.ne.s32.totalorder %s168, %s171
      %p180 = scmp.eq.s32.totalorder %s21, 1
      %p181 = por %p179, %p180
      %p182 = scmp.ne.s32.totalorder %s171, %s172
      %p183 = scmp.eq.s32.totalorder %s21, 0
      %p184 = por %p182, %p183
      %p185 = scmp.ne.s32.totalorder %s171, %s172
      %p186 = scmp.eq.s32.totalorder %s22, 1
      %p187 = por %p185, %p186
      %p189 = scmp.ne.s32.totalorder %s172, %s188
      %p190 = scmp.eq.s32.totalorder %s22, 0
      %p191 = por %p189, %p190
      %s192 = ssub.s32 %s24, %s31
      %p193 = scmp.eq.s32.totalorder %s192, 0
      %s195 = sadd.s32 %s194, 1
      %s196 = scalar_select %p193, %s194, %s195
      %p199 = pneg %p193
      %p200 = scmp.eq.s32.totalorder %s16, 1
      %p201 = por %p199, %p200
      %p202 = scmp.ne.s32.totalorder %s194, %s197
      %p203 = scmp.eq.s32.totalorder %s16, 0
      %p204 = por %p202, %p203
      %p205 = scmp.ne.s32.totalorder %s194, %s197
      %p206 = scmp.eq.s32.totalorder %s21, 1
      %p207 = por %p205, %p206
      %p208 = scmp.ne.s32.totalorder %s197, %s198
      %p209 = scmp.eq.s32.totalorder %s21, 0
      %p210 = por %p208, %p209
      %p211 = scmp.ne.s32.totalorder %s197, %s198
      %p212 = scmp.eq.s32.totalorder %s22, 1
      %p213 = por %p211, %p212
      %p215 = scmp.ne.s32.totalorder %s198, %s214
      %p216 = scmp.eq.s32.totalorder %s22, 0
      %p217 = por %p215, %p216
      %s218 = ssub.s32 %s24, %s31
      %p219 = scmp.eq.s32.totalorder %s218, 0
      %s221 = sadd.s32 %s220, 1
      %s222 = scalar_select %p219, %s220, %s221
      %p225 = pneg %p219
      %p226 = scmp.eq.s32.totalorder %s16, 1
      %p227 = por %p225, %p226
      %p228 = scmp.ne.s32.totalorder %s220, %s223
      %p229 = scmp.eq.s32.totalorder %s16, 0
      %p230 = por %p228, %p229
      %p231 = scmp.ne.s32.totalorder %s220, %s223
      %p232 = scmp.eq.s32.totalorder %s21, 1
      %p233 = por %p231, %p232
      %p234 = scmp.ne.s32.totalorder %s223, %s224
      %p235 = scmp.eq.s32.totalorder %s21, 0
      %p236 = por %p234, %p235
      %p237 = scmp.ne.s32.totalorder %s223, %s224
      %p238 = scmp.eq.s32.totalorder %s22, 1
      %p239 = por %p237, %p238
      %p241 = scmp.ne.s32.totalorder %s224, %s240
      %p242 = scmp.eq.s32.totalorder %s22, 0
      %p243 = por %p241, %p242
      %s244 = ssub.s32 %s23, %s35
      %p245 = scmp.eq.s32.totalorder %s244, 0
      %s247 = sadd.s32 %s246, 1
      %s248 = scalar_select %p245, %s246, %s247
      %p251 = pneg %p245
      %p252 = scmp.eq.s32.totalorder %s16, 1
      %p253 = por %p251, %p252
      %p254 = scmp.ne.s32.totalorder %s246, %s249
      %p255 = scmp.eq.s32.totalorder %s16, 0
      %p256 = por %p254, %p255
      %p257 = scmp.ne.s32.totalorder %s246, %s249
      %p258 = scmp.eq.s32.totalorder %s21, 1
      %p259 = por %p257, %p258
      %p260 = scmp.ne.s32.totalorder %s249, %s250
      %p261 = scmp.eq.s32.totalorder %s21, 0
      %p262 = por %p260, %p261
      %p263 = scmp.ne.s32.totalorder %s249, %s250
      %p264 = scmp.eq.s32.totalorder %s22, 1
      %p265 = por %p263, %p264
      %p267 = scmp.ne.s32.totalorder %s250, %s266
      %p268 = scmp.eq.s32.totalorder %s22, 0
      %p269 = por %p267, %p268
      %p270 = scmp.le.s32.totalorder 1, %s16
      %p271 = scmp.lt.s32.totalorder %s16, 3
      %p272 = pnand %p270, %p271
      %p273 = pneg %p272
      // Predicated region
      $region9: #{tpu_custom_call.1} parent=5 // pred_check
        _
      $region10: #{tpu_custom_call.1} parent=5 // pred_check_branch
        %275 = sbr.rel (%p272) target = $region12
      $region11: #{tpu_custom_call.1} parent=5 // pred_region
        %s276 = ssub.s32 %s16, 1
        // Predicated region
        $region13: #{tpu_custom_call.1} parent=11 // pred_check
          %p277 = pneg %p54
        $region14: #{tpu_custom_call.1} parent=11 // pred_check_branch
          %279 = sbr.rel (%p277) target = $region16
        $region15: #{tpu_custom_call.1} parent=11 // pred_region
          %s280 = smul.u32 2, %s25
          %s282 = ssub.s32 256, 256
          %283 = vsyncadd [#allocation4], %s282
          %s284 = smul.addr %s280, 128
          %s285 = scalar_lea.hbm %s0, %s284
          %s286 = sshll.u32 [#allocation3], 4
          %s287 = int_to_ptr.vmem [resolvable:$true] %s286
          %292 = dma.hbm_to_vmem [thread:$0]  %s285, 256, %s287, [#allocation4], 128, 128, 8
        $region16: #{tpu_custom_call.1} parent=11 // pred_fallthru
          _
      $region12: #{tpu_custom_call.1} parent=5 // pred_fallthru
        _
      %p293 = scmp.lt.s32.totalorder %s16, 2
      // Predicated region
      $region17: #{tpu_custom_call.1} parent=5 // pred_check
        %p294 = pneg %p293
      $region18: #{tpu_custom_call.1} parent=5 // pred_check_branch
        %296 = sbr.rel (%p294) target = $region20
      $region19: #{tpu_custom_call.1} parent=5 // pred_region
        // Predicated region
        $region21: #{tpu_custom_call.1} parent=19 // pred_check
          %p297 = pneg %p74
        $region22: #{tpu_custom_call.1} parent=19 // pred_check_branch
          %299 = sbr.rel (%p297) target = $region24
        $region23: #{tpu_custom_call.1} parent=19 // pred_region
          %p300 = scmp.lt.s32.totalorder %s24, 1
          %s301 = scalar_select %p300, %s24, 1
          %s302 = smul.addr %s301, 4
          %s303 = smul.addr %s302, 4
          %s304 = scalar_lea.vmem %s1, %s303
        $region24: #{tpu_custom_call.1} parent=19 // pred_fallthru
          _
        // Predicated region
        $region25: #{tpu_custom_call.1} parent=19 // pred_check
          %p305 = pneg %p100
        $region26: #{tpu_custom_call.1} parent=19 // pred_check_branch
          %307 = sbr.rel (%p305) target = $region28
        $region27: #{tpu_custom_call.1} parent=19 // pred_region
          %p308 = scmp.lt.s32.totalorder %s24, 1
          %s309 = scalar_select %p308, %s24, 1
          %s310 = scalar_lea.vmem %s2, %s309
        $region28: #{tpu_custom_call.1} parent=19 // pred_fallthru
          _
        // Predicated region
        $region29: #{tpu_custom_call.1} parent=19 // pred_check
          %p311 = pneg %p126
        $region30: #{tpu_custom_call.1} parent=19 // pred_check_branch
          %313 = sbr.rel (%p311) target = $region32
        $region31: #{tpu_custom_call.1} parent=19 // pred_region
          %p314 = scmp.lt.s32.totalorder %s24, 1
          %s315 = scalar_select %p314, %s24, 1
          %s316 = smul.addr %s315, 4
          %s317 = smul.addr %s316, 4
          %s318 = scalar_lea.vmem %s3, %s317
        $region32: #{tpu_custom_call.1} parent=19 // pred_fallthru
          _
        // Predicated region
        $region33: #{tpu_custom_call.1} parent=19 // pred_check
          %p319 = pneg %p152
        $region34: #{tpu_custom_call.1} parent=19 // pred_check_branch
          %321 = sbr.rel (%p319) target = $region36
        $region35: #{tpu_custom_call.1} parent=19 // pred_region
          %p322 = scmp.lt.s32.totalorder %s24, 1
          %s323 = scalar_select %p322, %s24, 1
          %s324 = smul.addr %s323, 4
          %s325 = smul.addr %s324, 4
          %s326 = scalar_lea.vmem %s4, %s325
        $region36: #{tpu_custom_call.1} parent=19 // pred_fallthru
          _
        // Predicated region
        $region37: #{tpu_custom_call.1} parent=19 // pred_check
          %p327 = pneg %p178
        $region38: #{tpu_custom_call.1} parent=19 // pred_check_branch
          %329 = sbr.rel (%p327) target = $region40
        $region39: #{tpu_custom_call.1} parent=19 // pred_region
          %p330 = scmp.lt.s32.totalorder %s24, 1
          %s331 = scalar_select %p330, %s24, 1
          %s332 = scalar_lea.vmem %s5, %s331
        $region40: #{tpu_custom_call.1} parent=19 // pred_fallthru
          _
        // Predicated region
        $region41: #{tpu_custom_call.1} parent=19 // pred_check
          %p333 = pneg %p204
        $region42: #{tpu_custom_call.1} parent=19 // pred_check_branch
          %335 = sbr.rel (%p333) target = $region44
        $region43: #{tpu_custom_call.1} parent=19 // pred_region
          %p336 = scmp.lt.s32.totalorder %s24, 1
          %s337 = scalar_select %p336, %s24, 1
          %s338 = smul.addr %s337, 8
          %s339 = smul.addr %s338, 4
          %s340 = scalar_lea.vmem %s6, %s339
        $region44: #{tpu_custom_call.1} parent=19 // pred_fallthru
          _
        // Predicated region
        $region45: #{tpu_custom_call.1} parent=19 // pred_check
          %p341 = pneg %p230
        $region46: #{tpu_custom_call.1} parent=19 // pred_check_branch
          %343 = sbr.rel (%p341) target = $region48
        $region47: #{tpu_custom_call.1} parent=19 // pred_region
          %p344 = scmp.lt.s32.totalorder %s24, 1
          %s345 = scalar_select %p344, %s24, 1
          %s346 = smul.addr %s345, 8
          %s347 = scalar_lea.vmem %s7, %s346
        $region48: #{tpu_custom_call.1} parent=19 // pred_fallthru
          _
      $region20: #{tpu_custom_call.1} parent=5 // pred_fallthru
        _
      %p348 = scmp.le.s32.totalorder 1, %s16
      %p349 = scmp.lt.s32.totalorder %s16, 3
      %p350 = pnand %p348, %p349
      %p351 = pneg %p350
      // Predicated region
      $region49: #{tpu_custom_call.1} parent=5 // pred_check
        _
      $region50: #{tpu_custom_call.1} parent=5 // pred_check_branch
        %353 = sbr.rel (%p350) target = $region52
      $region51: #{tpu_custom_call.1} parent=5 // pred_region
        %s354 = ssub.s32 %s16, 1
        // Predicated region
        $region53: #{tpu_custom_call.1} parent=51 // pred_check
          %p355 = pneg %p54
        $region54: #{tpu_custom_call.1} parent=51 // pred_check_branch
          %357 = sbr.rel (%p355) target = $region56
        $region55: #{tpu_custom_call.1} parent=51 // pred_region
          %358 = dma.done [#allocation4], 256
        $region56: #{tpu_custom_call.1} parent=51 // pred_fallthru
          _
        %p359 = pneg %p54
        %p360 = pneg %p51
        %p361 = scmp.lt.s32.totalorder %s26, 1
        %s362 = scalar_select %p361, %s26, 1
        %s363 = smul.addr %s362, 4
        %s364 = smul.addr %s363, 4
        %s365 = scalar_lea.vmem %s1, %s364
        %p366 = pneg %p80
        %p367 = pneg %p77
        %p368 = scmp.lt.s32.totalorder %s26, 1
        %s369 = scalar_select %p368, %s26, 1
        %s370 = scalar_lea.vmem %s2, %s369
        %p371 = pneg %p106
        %p372 = pneg %p103
        %p373 = scmp.lt.s32.totalorder %s26, 1
        %s374 = scalar_select %p373, %s26, 1
        %s375 = smul.addr %s374, 4
        %s376 = smul.addr %s375, 4
        %s377 = scalar_lea.vmem %s3, %s376
        %p378 = pneg %p132
        %p379 = pneg %p129
        %p380 = scmp.lt.s32.totalorder %s26, 1
        %s381 = scalar_select %p380, %s26, 1
        %s382 = smul.addr %s381, 4
        %s383 = smul.addr %s382, 4
        %s384 = scalar_lea.vmem %s4, %s383
        %p385 = pneg %p158
        %p386 = pneg %p155
        %p387 = scmp.lt.s32.totalorder %s26, 1
        %s388 = scalar_select %p387, %s26, 1
        %s389 = scalar_lea.vmem %s5, %s388
        %p390 = pneg %p184
        %p391 = pneg %p181
        %p392 = scmp.lt.s32.totalorder %s26, 1
        %s393 = scalar_select %p392, %s26, 1
        %s394 = smul.addr %s393, 8
        %s395 = smul.addr %s394, 4
        %s396 = scalar_lea.vmem %s6, %s395
        %p397 = pneg %p210
        %p398 = pneg %p207
        %p399 = scmp.lt.s32.totalorder %s26, 1
        %s400 = scalar_select %p399, %s26, 1
        %s401 = smul.addr %s400, 8
        %s402 = scalar_lea.vmem %s7, %s401
        %p403 = pneg %p236
        %p404 = pneg %p233
        %p405 = pneg %p262
        %p406 = pneg %p259
        %s407 = smul.u32 2, %s25
        %p408 = scmp.lt.s32.totalorder %s26, 1
        %s409 = scalar_select %p408, %s26, 1
        %s410 = smul.addr %s409, 4
        %s411 = smul.addr %s410, 4
        %s412 = scalar_lea.vmem %s1, %s411
        %p413 = scmp.lt.s32.totalorder %s26, 1
        %s414 = scalar_select %p413, %s26, 1
        %s415 = scalar_lea.vmem %s2, %s414
        %p416 = scmp.lt.s32.totalorder %s26, 1
        %s417 = scalar_select %p416, %s26, 1
        %s418 = smul.addr %s417, 4
        %s419 = smul.addr %s418, 4
        %s420 = scalar_lea.vmem %s3, %s419
        %p421 = scmp.lt.s32.totalorder %s26, 1
        %s422 = scalar_select %p421, %s26, 1
        %s423 = smul.addr %s422, 4
        %s424 = smul.addr %s423, 4
        %s425 = scalar_lea.vmem %s4, %s424
        %p426 = scmp.lt.s32.totalorder %s26, 1
        %s427 = scalar_select %p426, %s26, 1
        %s428 = scalar_lea.vmem %s5, %s427
        %p429 = scmp.lt.s32.totalorder %s26, 1
        %s430 = scalar_select %p429, %s26, 1
        %s431 = smul.addr %s430, 8
        %s432 = smul.addr %s431, 4
        %s433 = scalar_lea.vmem %s6, %s432
        %p434 = scmp.lt.s32.totalorder %s26, 1
        %s435 = scalar_select %p434, %s26, 1
        %s436 = smul.addr %s435, 8
        %s437 = scalar_lea.vmem %s7, %s436
        %s438 = smul.u32 2, %s25
        %p440 = scmp.eq.s32.totalorder %s26, 0
        // Predicated region
        $region57: #{tpu_custom_call.1} parent=51 // pred_check
          %p441 = pneg %p440
        $region58: #{tpu_custom_call.1} parent=51 // pred_check_branch
          %443 = sbr.rel (%p441) target = $region60
        $region59: #{tpu_custom_call.1} parent=51 // pred_region
          %v444 = vld [vmem:[#allocation3] sm:$0xff]
          %v445 = vld [vmem:[#allocation3 + $0x8] sm:$0xff]
          %vm446 = vcmask 261120
          %447 = vst.msk [vmem:[#allocation6] sm:$0xff] %vm446, %v444
          %448 = vst.msk [vmem:[#allocation6 + $0x8] sm:$0xff] %vm446, %v445
        $region60: #{tpu_custom_call.1} parent=51 // pred_fallthru
          _
        %v449 = vld [vmem:[#allocation6] sm:$0xff]
        %v450 = vld [vmem:[#allocation6 + $0x8] sm:$0xff]
        %v451 = vpack.c.bf16 %v450, %v449
        %v452 = vld [vmem:[%s412] sm:$0xf]
        %v453 = vld [vmem:[%s412 + $0x4] sm:$0xf]
        %v454 = vld [vmem:[%s412 + $0x8] sm:$0xf]
        %v455 = vld [vmem:[%s412 + $0xc] sm:$0xf]
        %v456 = vld [vmem:[%s415] sm:$0x1]
        %v458 = vlaneseq
        %v459 = vshrl.u32 %v458, 7
        %v460 = vsub.s32 0, %v459
        %v461 = vrot.slane %v456, %v460
        %v467 = vunpack.c.l.b16 %v452
        %v468 = vunpack.c.l.b16 %v453
        %v469 = vunpack.c.l.b16 %v454
        %v470 = vunpack.c.l.b16 %v455
        %v471 = vpack.c.b16 %v468, %v467
        %v472 = vpack.c.b16 %v470, %v469
        %vm475 = vcmask 261120
        %v477 = vsel %vm475, %v451, 0
        %479 = vmatprep.subr.bf16.mxu0 0
        %480 = vmatpush1.bf16.msra.mxu0 0
        %481 = vmatprep.subr.bf16.mxu0 0
        %482 = vmatpush1.bf16.msra.mxu0 0
        %483 = vmatprep.subr.bf16.mxu0 0
        %484 = vmatpush1.bf16.msra.mxu0 0
        %485 = vmatprep.subr.bf16.mxu0 0
        %486 = vmatpush1.bf16.msra.mxu0 0
        %487 = vmatprep.subr.bf16.mxu0 0
        %488 = vmatpush1.bf16.msra.mxu0 0
        %489 = vmatprep.subr.bf16.mxu0 0
        %490 = vmatpush1.bf16.msra.mxu0 0
        %491 = vmatprep.subr.bf16.mxu0 0
        %492 = vmatpush1.bf16.msra.mxu0 %v472
        %493 = vmatprep.subr.bf16.mxu0 0
        %494 = vmatpush1.bf16.msra.mxu0 %v471
        %495 = vmatprep.subr.bf16.mxu0 0
        %496 = vmatpush2.bf16.msra.mxu0 0
        %497 = vmatprep.subr.bf16.mxu0 0
        %498 = vmatpush2.bf16.msra.mxu0 0
        %499 = vmatprep.subr.bf16.mxu0 0
        %500 = vmatpush2.bf16.msra.mxu0 0
        %501 = vmatprep.subr.bf16.mxu0 0
        %502 = vmatpush2.bf16.msra.mxu0 0
        %503 = vmatprep.subr.bf16.mxu0 0
        %504 = vmatpush2.bf16.msra.mxu0 0
        %505 = vmatprep.subr.bf16.mxu0 0
        %506 = vmatpush2.bf16.msra.mxu0 0
        %507 = vmatprep.subr.bf16.mxu0 0
        %508 = vmatpush2.bf16.msra.mxu0 0
        %509 = vmatprep.subr.bf16.mxu0 0
        %510 = vmatpush2.bf16.msra.mxu0 0
        %511 = vmatprep.mubr.bf16.mxu0 0
        %512 = vmatmul.mubr.bf16.gmra.mxu0 %v477
        %v513 = vpop.f32.mrf.mxu0
        %v514 = vadd.f32 %v461, %v513
        %v515 = vpop.f32.mrf.mxu0
        %v516 = vpop.f32.mrf.mxu0
        %v517 = vadd.f32 %v461, %v516
        %v518 = vpop.f32.mrf.mxu0
        %519 = vdwg.mxu0
        %v520 = vpack.c.bf16 %v514, %v514
        %522 = vrot.lane.b32.xlu0 %v520, 96
        %v523 = vpop.permute.xlu0 %522
        %vm524 = vcmask 64512
        %v526 = vsel %vm524, %v520, 0
        %v529 = vsel %vm524, %v523, 0
        %531 = vmatprep.subr.bf16.mxu0 0
        %532 = vmatpush1.bf16.xpose.msra.mxu0 0
        %533 = vmatprep.subr.bf16.mxu0 0
        %534 = vmatpush1.bf16.xpose.msra.mxu0 0
        %535 = vmatprep.subr.bf16.mxu0 0
        %536 = vmatpush1.bf16.xpose.msra.mxu0 0
        %537 = vmatprep.subr.bf16.mxu0 0
        %538 = vmatpush1.bf16.xpose.msra.mxu0 0
        %539 = vmatprep.subr.bf16.mxu0 0
        %540 = vmatpush1.bf16.xpose.msra.mxu0 0
        %541 = vmatprep.subr.bf16.mxu0 0
        %542 = vmatpush1.bf16.xpose.msra.mxu0 0
        %543 = vmatprep.subr.bf16.mxu0 0
        %544 = vmatpush1.bf16.xpose.msra.mxu0 0
        %545 = vmatprep.subr.bf16.mxu0 0
        %546 = vmatpush1.bf16.xpose.msra.mxu0 %v529
        %547 = vmatprep.subr.bf16.mxu0 0
        %548 = vmatpush2.bf16.xpose.msra.mxu0 0
        %549 = vmatprep.subr.bf16.mxu0 0
        %550 = vmatpush2.bf16.xpose.msra.mxu0 0
        %551 = vmatprep.subr.bf16.mxu0 0
        %552 = vmatpush2.bf16.xpose.msra.mxu0 0
        %553 = vmatprep.subr.bf16.mxu0 0
        %554 = vmatpush2.bf16.xpose.msra.mxu0 0
        %555 = vmatprep.subr.bf16.mxu0 0
        %556 = vmatpush2.bf16.xpose.msra.mxu0 0
        %557 = vmatprep.subr.bf16.mxu0 0
        %558 = vmatpush2.bf16.xpose.msra.mxu0 0
        %559 = vmatprep.subr.bf16.mxu0 0
        %560 = vmatpush2.bf16.xpose.msra.mxu0 0
        %561 = vmatprep.subr.bf16.mxu0 0
        %562 = vmatpush2.bf16.xpose.msra.mxu0 0
        %563 = vmatprep.mubr.bf16.mxu0 0
        %564 = vmatmul.mubr.bf16.gmra.mxu0 %v526
        %v565 = vpop.f32.mrf.mxu0
        %v566 = vadd.f32 0.0, %v565
        %v567 = vpop.f32.mrf.mxu0
        %v568 = vpop.f32.mrf.mxu0
        %v569 = vpop.f32.mrf.mxu0
        %570 = vdwg.mxu0
        %v571 = vsel %vm524, %v566, -inf
        %572 = vmax.xlane.f32.xlu0 %v571
        %v573 = vpop.xlane.xlu0 %572
        %v574 = vsub.f32 %v566, %v573
        %v575 = vmul.f32 %v574, 1.442695
        %v576 = vpow.pop %v575
        %v577 = vsel %vm524, %v576, 0.0
        %578 = vadd.xlane.f32.xlu0 %v577
        %v579 = vpop.xlane.xlu0 %578
        %v580 = vpack.c.bf16 %v576, %v576
        %581 = vrot.lane.b32.xlu0 %v520, 64
        %v582 = vpop.permute.xlu0 %581
        %v584 = vsel %vm524, %v580, 0
        %vm586 = vcmask 1043456
        %v588 = vsel %vm586, %v582, 0
        %590 = vmatprep.subr.bf16.mxu0 0
        %591 = vmatpush1.bf16.msra.mxu0 0
        %592 = vmatprep.subr.bf16.mxu0 0
        %593 = vmatpush1.bf16.msra.mxu0 0
        %594 = vmatprep.subr.bf16.mxu0 0
        %595 = vmatpush1.bf16.msra.mxu0 0
        %596 = vmatprep.subr.bf16.mxu0 0
        %597 = vmatpush1.bf16.msra.mxu0 0
        %598 = vmatprep.subr.bf16.mxu0 0
        %599 = vmatpush1.bf16.msra.mxu0 0
        %600 = vmatprep.subr.bf16.mxu0 0
        %601 = vmatpush1.bf16.msra.mxu0 0
        %602 = vmatprep.subr.bf16.mxu0 0
        %603 = vmatpush1.bf16.msra.mxu0 0
        %604 = vmatprep.subr.bf16.mxu0 0
        %605 = vmatpush1.bf16.msra.mxu0 %v588
        %606 = vmatprep.subr.bf16.mxu0 0
        %607 = vmatpush2.bf16.msra.mxu0 0
        %608 = vmatprep.subr.bf16.mxu0 0
        %609 = vmatpush2.bf16.msra.mxu0 0
        %610 = vmatprep.subr.bf16.mxu0 0
        %611 = vmatpush2.bf16.msra.mxu0 0
        %612 = vmatprep.subr.bf16.mxu0 0
        %613 = vmatpush2.bf16.msra.mxu0 0
        %614 = vmatprep.subr.bf16.mxu0 0
        %615 = vmatpush2.bf16.msra.mxu0 0
        %616 = vmatprep.subr.bf16.mxu0 0
        %617 = vmatpush2.bf16.msra.mxu0 0
        %618 = vmatprep.subr.bf16.mxu0 0
        %619 = vmatpush2.bf16.msra.mxu0 0
        %620 = vmatprep.subr.bf16.mxu0 0
        %621 = vmatpush2.bf16.msra.mxu0 0
        %622 = vmatprep.mubr.bf16.mxu0 0
        %623 = vmatmul.mubr.bf16.gmra.mxu0 %v584
        %v624 = vpop.f32.mrf.mxu0
        %v625 = vadd.f32 0.0, %v624
        %v626 = vpop.f32.mrf.mxu0
        %v627 = vpop.f32.mrf.mxu0
        %v628 = vpop.f32.mrf.mxu0
        %629 = vdwg.mxu0
        %v630 = vrcp.pop %v579
        %v631 = vmul.f32 %v625, %v630
        %632 = vst.msk [vmem:[#allocation2] sm:$0xff] %vm524, %v631
        %633 = vrot.lane.b32.xlu0 %v520, 120
        %v634 = vpop.permute.xlu0 %633
        %635 = vrot.lane.b32.xlu0 %v520, 88
        %v636 = vpop.permute.xlu0 %635
        %v638 = vsel %vm524, %v634, 0
        %v641 = vsel %vm524, %v636, 0
        %643 = vmatprep.subr.bf16.mxu0 0
        %644 = vmatpush1.bf16.xpose.msra.mxu0 0
        %645 = vmatprep.subr.bf16.mxu0 0
        %646 = vmatpush1.bf16.xpose.msra.mxu0 0
        %647 = vmatprep.subr.bf16.mxu0 0
        %648 = vmatpush1.bf16.xpose.msra.mxu0 0
        %649 = vmatprep.subr.bf16.mxu0 0
        %650 = vmatpush1.bf16.xpose.msra.mxu0 0
        %651 = vmatprep.subr.bf16.mxu0 0
        %652 = vmatpush1.bf16.xpose.msra.mxu0 0
        %653 = vmatprep.subr.bf16.mxu0 0
        %654 = vmatpush1.bf16.xpose.msra.mxu0 0
        %655 = vmatprep.subr.bf16.mxu0 0
        %656 = vmatpush1.bf16.xpose.msra.mxu0 0
        %657 = vmatprep.subr.bf16.mxu0 0
        %658 = vmatpush1.bf16.xpose.msra.mxu0 %v641
        %659 = vmatprep.subr.bf16.mxu0 0
        %660 = vmatpush2.bf16.xpose.msra.mxu0 0
        %661 = vmatprep.subr.bf16.mxu0 0
        %662 = vmatpush2.bf16.xpose.msra.mxu0 0
        %663 = vmatprep.subr.bf16.mxu0 0
        %664 = vmatpush2.bf16.xpose.msra.mxu0 0
        %665 = vmatprep.subr.bf16.mxu0 0
        %666 = vmatpush2.bf16.xpose.msra.mxu0 0
        %667 = vmatprep.subr.bf16.mxu0 0
        %668 = vmatpush2.bf16.xpose.msra.mxu0 0
        %669 = vmatprep.subr.bf16.mxu0 0
        %670 = vmatpush2.bf16.xpose.msra.mxu0 0
        %671 = vmatprep.subr.bf16.mxu0 0
        %672 = vmatpush2.bf16.xpose.msra.mxu0 0
        %673 = vmatprep.subr.bf16.mxu0 0
        %674 = vmatpush2.bf16.xpose.msra.mxu0 0
        %675 = vmatprep.mubr.bf16.mxu0 0
        %676 = vmatmul.mubr.bf16.gmra.mxu0 %v638
        %v677 = vpop.f32.mrf.mxu0
        %v678 = vadd.f32 0.0, %v677
        %v679 = vpop.f32.mrf.mxu0
        %v680 = vpop.f32.mrf.mxu0
        %v681 = vpop.f32.mrf.mxu0
        %682 = vdwg.mxu0
        %v683 = vsel %vm524, %v678, -inf
        %684 = vmax.xlane.f32.xlu0 %v683
        %v685 = vpop.xlane.xlu0 %684
        %v686 = vsub.f32 %v678, %v685
        %v687 = vmul.f32 %v686, 1.442695
        %v688 = vpow.pop %v687
        %v689 = vsel %vm524, %v688, 0.0
        %690 = vadd.xlane.f32.xlu0 %v689
        %v691 = vpop.xlane.xlu0 %690
        %v692 = vpack.c.bf16 %v688, %v688
        %693 = vrot.lane.b32.xlu0 %v520, 56
        %v694 = vpop.permute.xlu0 %693
        %v696 = vsel %vm524, %v692, 0
        %v699 = vsel %vm586, %v694, 0
        %701 = vmatprep.subr.bf16.mxu0 0
        %702 = vmatpush1.bf16.msra.mxu0 0
        %703 = vmatprep.subr.bf16.mxu0 0
        %704 = vmatpush1.bf16.msra.mxu0 0
        %705 = vmatprep.subr.bf16.mxu0 0
        %706 = vmatpush1.bf16.msra.mxu0 0
        %707 = vmatprep.subr.bf16.mxu0 0
        %708 = vmatpush1.bf16.msra.mxu0 0
        %709 = vmatprep.subr.bf16.mxu0 0
        %710 = vmatpush1.bf16.msra.mxu0 0
        %711 = vmatprep.subr.bf16.mxu0 0
        %712 = vmatpush1.bf16.msra.mxu0 0
        %713 = vmatprep.subr.bf16.mxu0 0
        %714 = vmatpush1.bf16.msra.mxu0 0
        %715 = vmatprep.subr.bf16.mxu0 0
        %716 = vmatpush1.bf16.msra.mxu0 %v699
        %717 = vmatprep.subr.bf16.mxu0 0
        %718 = vmatpush2.bf16.msra.mxu0 0
        %719 = vmatprep.subr.bf16.mxu0 0
        %720 = vmatpush2.bf16.msra.mxu0 0
        %721 = vmatprep.subr.bf16.mxu0 0
        %722 = vmatpush2.bf16.msra.mxu0 0
        %723 = vmatprep.subr.bf16.mxu0 0
        %724 = vmatpush2.bf16.msra.mxu0 0
        %725 = vmatprep.subr.bf16.mxu0 0
        %726 = vmatpush2.bf16.msra.mxu0 0
        %727 = vmatprep.subr.bf16.mxu0 0
        %728 = vmatpush2.bf16.msra.mxu0 0
        %729 = vmatprep.subr.bf16.mxu0 0
        %730 = vmatpush2.bf16.msra.mxu0 0
        %731 = vmatprep.subr.bf16.mxu0 0
        %732 = vmatpush2.bf16.msra.mxu0 0
        %733 = vmatprep.mubr.bf16.mxu0 0
        %734 = vmatmul.mubr.bf16.gmra.mxu0 %v696
        %v735 = vpop.f32.mrf.mxu0
        %v736 = vadd.f32 0.0, %v735
        %v737 = vpop.f32.mrf.mxu0
        %v738 = vpop.f32.mrf.mxu0
        %v739 = vpop.f32.mrf.mxu0
        %740 = vdwg.mxu0
        %v741 = vrcp.pop %v691
        %v742 = vmul.f32 %v736, %v741
        %744 = vrot.lane.b32.xlu0 %v742, 8
        %v745 = vpop.permute.xlu0 %744
        %vm747 = vcmask 130112
        %748 = vst.msk [vmem:[#allocation2] sm:$0xff] %vm747, %v745
        %749 = vrot.lane.b32.xlu0 %v520, 112
        %v750 = vpop.permute.xlu0 %749
        %751 = vrot.lane.b32.xlu0 %v520, 80
        %v752 = vpop.permute.xlu0 %751
        %v754 = vsel %vm524, %v750, 0
        %v757 = vsel %vm524, %v752, 0
        %759 = vmatprep.subr.bf16.mxu0 0
        %760 = vmatpush1.bf16.xpose.msra.mxu0 0
        %761 = vmatprep.subr.bf16.mxu0 0
        %762 = vmatpush1.bf16.xpose.msra.mxu0 0
        %763 = vmatprep.subr.bf16.mxu0 0
        %764 = vmatpush1.bf16.xpose.msra.mxu0 0
        %765 = vmatprep.subr.bf16.mxu0 0
        %766 = vmatpush1.bf16.xpose.msra.mxu0 0
        %767 = vmatprep.subr.bf16.mxu0 0
        %768 = vmatpush1.bf16.xpose.msra.mxu0 0
        %769 = vmatprep.subr.bf16.mxu0 0
        %770 = vmatpush1.bf16.xpose.msra.mxu0 0
        %771 = vmatprep.subr.bf16.mxu0 0
        %772 = vmatpush1.bf16.xpose.msra.mxu0 0
        %773 = vmatprep.subr.bf16.mxu0 0
        %774 = vmatpush1.bf16.xpose.msra.mxu0 %v757
        %775 = vmatprep.subr.bf16.mxu0 0
        %776 = vmatpush2.bf16.xpose.msra.mxu0 0
        %777 = vmatprep.subr.bf16.mxu0 0
        %778 = vmatpush2.bf16.xpose.msra.mxu0 0
        %779 = vmatprep.subr.bf16.mxu0 0
        %780 = vmatpush2.bf16.xpose.msra.mxu0 0
        %781 = vmatprep.subr.bf16.mxu0 0
        %782 = vmatpush2.bf16.xpose.msra.mxu0 0
        %783 = vmatprep.subr.bf16.mxu0 0
        %784 = vmatpush2.bf16.xpose.msra.mxu0 0
        %785 = vmatprep.subr.bf16.mxu0 0
        %786 = vmatpush2.bf16.xpose.msra.mxu0 0
        %787 = vmatprep.subr.bf16.mxu0 0
        %788 = vmatpush2.bf16.xpose.msra.mxu0 0
        %789 = vmatprep.subr.bf16.mxu0 0
        %790 = vmatpush2.bf16.xpose.msra.mxu0 0
        %791 = vmatprep.mubr.bf16.mxu0 0
        %792 = vmatmul.mubr.bf16.gmra.mxu0 %v754
        %v793 = vpop.f32.mrf.mxu0
        %v794 = vadd.f32 0.0, %v793
        %v795 = vpop.f32.mrf.mxu0
        %v796 = vpop.f32.mrf.mxu0
        %v797 = vpop.f32.mrf.mxu0
        %798 = vdwg.mxu0
        %v799 = vsel %vm524, %v794, -inf
        %800 = vmax.xlane.f32.xlu0 %v799
        %v801 = vpop.xlane.xlu0 %800
        %v802 = vsub.f32 %v794, %v801
        %v803 = vmul.f32 %v802, 1.442695
        %v804 = vpow.pop %v803
        %v805 = vsel %vm524, %v804, 0.0
        %806 = vadd.xlane.f32.xlu0 %v805
        %v807 = vpop.xlane.xlu0 %806
        %v808 = vpack.c.bf16 %v804, %v804
        %809 = vrot.lane.b32.xlu0 %v520, 48
        %v810 = vpop.permute.xlu0 %809
        %v812 = vsel %vm524, %v808, 0
        %v815 = vsel %vm586, %v810, 0
        %817 = vmatprep.subr.bf16.mxu0 0
        %818 = vmatpush1.bf16.msra.mxu0 0
        %819 = vmatprep.subr.bf16.mxu0 0
        %820 = vmatpush1.bf16.msra.mxu0 0
        %821 = vmatprep.subr.bf16.mxu0 0
        %822 = vmatpush1.bf16.msra.mxu0 0
        %823 = vmatprep.subr.bf16.mxu0 0
        %824 = vmatpush1.bf16.msra.mxu0 0
        %825 = vmatprep.subr.bf16.mxu0 0
        %826 = vmatpush1.bf16.msra.mxu0 0
        %827 = vmatprep.subr.bf16.mxu0 0
        %828 = vmatpush1.bf16.msra.mxu0 0
        %829 = vmatprep.subr.bf16.mxu0 0
        %830 = vmatpush1.bf16.msra.mxu0 0
        %831 = vmatprep.subr.bf16.mxu0 0
        %832 = vmatpush1.bf16.msra.mxu0 %v815
        %833 = vmatprep.subr.bf16.mxu0 0
        %834 = vmatpush2.bf16.msra.mxu0 0
        %835 = vmatprep.subr.bf16.mxu0 0
        %836 = vmatpush2.bf16.msra.mxu0 0
        %837 = vmatprep.subr.bf16.mxu0 0
        %838 = vmatpush2.bf16.msra.mxu0 0
        %839 = vmatprep.subr.bf16.mxu0 0
        %840 = vmatpush2.bf16.msra.mxu0 0
        %841 = vmatprep.subr.bf16.mxu0 0
        %842 = vmatpush2.bf16.msra.mxu0 0
        %843 = vmatprep.subr.bf16.mxu0 0
        %844 = vmatpush2.bf16.msra.mxu0 0
        %845 = vmatprep.subr.bf16.mxu0 0
        %846 = vmatpush2.bf16.msra.mxu0 0
        %847 = vmatprep.subr.bf16.mxu0 0
        %848 = vmatpush2.bf16.msra.mxu0 0
        %849 = vmatprep.mubr.bf16.mxu0 0
        %850 = vmatmul.mubr.bf16.gmra.mxu0 %v812
        %v851 = vpop.f32.mrf.mxu0
        %v852 = vadd.f32 0.0, %v851
        %v853 = vpop.f32.mrf.mxu0
        %v854 = vpop.f32.mrf.mxu0
        %v855 = vpop.f32.mrf.mxu0
        %856 = vdwg.mxu0
        %v857 = vrcp.pop %v807
        %v858 = vmul.f32 %v852, %v857
        %860 = vrot.lane.b32.xlu0 %v858, 16
        %v861 = vpop.permute.xlu0 %860
        %vm863 = vcmask 195712
        %864 = vst.msk [vmem:[#allocation2] sm:$0xff] %vm863, %v861
        %865 = vrot.lane.b32.xlu0 %v520, 104
        %v866 = vpop.permute.xlu0 %865
        %867 = vrot.lane.b32.xlu0 %v520, 72
        %v868 = vpop.permute.xlu0 %867
        %v870 = vsel %vm524, %v866, 0
        %v873 = vsel %vm524, %v868, 0
        %875 = vmatprep.subr.bf16.mxu0 0
        %876 = vmatpush1.bf16.xpose.msra.mxu0 0
        %877 = vmatprep.subr.bf16.mxu0 0
        %878 = vmatpush1.bf16.xpose.msra.mxu0 0
        %879 = vmatprep.subr.bf16.mxu0 0
        %880 = vmatpush1.bf16.xpose.msra.mxu0 0
        %881 = vmatprep.subr.bf16.mxu0 0
        %882 = vmatpush1.bf16.xpose.msra.mxu0 0
        %883 = vmatprep.subr.bf16.mxu0 0
        %884 = vmatpush1.bf16.xpose.msra.mxu0 0
        %885 = vmatprep.subr.bf16.mxu0 0
        %886 = vmatpush1.bf16.xpose.msra.mxu0 0
        %887 = vmatprep.subr.bf16.mxu0 0
        %888 = vmatpush1.bf16.xpose.msra.mxu0 0
        %889 = vmatprep.subr.bf16.mxu0 0
        %890 = vmatpush1.bf16.xpose.msra.mxu0 %v873
        %891 = vmatprep.subr.bf16.mxu0 0
        %892 = vmatpush2.bf16.xpose.msra.mxu0 0
        %893 = vmatprep.subr.bf16.mxu0 0
        %894 = vmatpush2.bf16.xpose.msra.mxu0 0
        %895 = vmatprep.subr.bf16.mxu0 0
        %896 = vmatpush2.bf16.xpose.msra.mxu0 0
        %897 = vmatprep.subr.bf16.mxu0 0
        %898 = vmatpush2.bf16.xpose.msra.mxu0 0
        %899 = vmatprep.subr.bf16.mxu0 0
        %900 = vmatpush2.bf16.xpose.msra.mxu0 0
        %901 = vmatprep.subr.bf16.mxu0 0
        %902 = vmatpush2.bf16.xpose.msra.mxu0 0
        %903 = vmatprep.subr.bf16.mxu0 0
        %904 = vmatpush2.bf16.xpose.msra.mxu0 0
        %905 = vmatprep.subr.bf16.mxu0 0
        %906 = vmatpush2.bf16.xpose.msra.mxu0 0
        %907 = vmatprep.mubr.bf16.mxu0 0
        %908 = vmatmul.mubr.bf16.gmra.mxu0 %v870
        %v909 = vpop.f32.mrf.mxu0
        %v910 = vadd.f32 0.0, %v909
        %v911 = vpop.f32.mrf.mxu0
        %v912 = vpop.f32.mrf.mxu0
        %v913 = vpop.f32.mrf.mxu0
        %914 = vdwg.mxu0
        %v915 = vsel %vm524, %v910, -inf
        %916 = vmax.xlane.f32.xlu0 %v915
        %v917 = vpop.xlane.xlu0 %916
        %v918 = vsub.f32 %v910, %v917
        %v919 = vmul.f32 %v918, 1.442695
        %v920 = vpow.pop %v919
        %v921 = vsel %vm524, %v920, 0.0
        %922 = vadd.xlane.f32.xlu0 %v921
        %v923 = vpop.xlane.xlu0 %922
        %v924 = vpack.c.bf16 %v920, %v920
        %925 = vrot.lane.b32.xlu0 %v520, 40
        %v926 = vpop.permute.xlu0 %925
        %v928 = vsel %vm524, %v924, 0
        %v931 = vsel %vm586, %v926, 0
        %933 = vmatprep.subr.bf16.mxu0 0
        %934 = vmatpush1.bf16.msra.mxu0 0
        %935 = vmatprep.subr.bf16.mxu0 0
        %936 = vmatpush1.bf16.msra.mxu0 0
        %937 = vmatprep.subr.bf16.mxu0 0
        %938 = vmatpush1.bf16.msra.mxu0 0
        %939 = vmatprep.subr.bf16.mxu0 0
        %940 = vmatpush1.bf16.msra.mxu0 0
        %941 = vmatprep.subr.bf16.mxu0 0
        %942 = vmatpush1.bf16.msra.mxu0 0
        %943 = vmatprep.subr.bf16.mxu0 0
        %944 = vmatpush1.bf16.msra.mxu0 0
        %945 = vmatprep.subr.bf16.mxu0 0
        %946 = vmatpush1.bf16.msra.mxu0 0
        %947 = vmatprep.subr.bf16.mxu0 0
        %948 = vmatpush1.bf16.msra.mxu0 %v931
        %949 = vmatprep.subr.bf16.mxu0 0
        %950 = vmatpush2.bf16.msra.mxu0 0
        %951 = vmatprep.subr.bf16.mxu0 0
        %952 = vmatpush2.bf16.msra.mxu0 0
        %953 = vmatprep.subr.bf16.mxu0 0
        %954 = vmatpush2.bf16.msra.mxu0 0
        %955 = vmatprep.subr.bf16.mxu0 0
        %956 = vmatpush2.bf16.msra.mxu0 0
        %957 = vmatprep.subr.bf16.mxu0 0
        %958 = vmatpush2.bf16.msra.mxu0 0
        %959 = vmatprep.subr.bf16.mxu0 0
        %960 = vmatpush2.bf16.msra.mxu0 0
        %961 = vmatprep.subr.bf16.mxu0 0
        %962 = vmatpush2.bf16.msra.mxu0 0
        %963 = vmatprep.subr.bf16.mxu0 0
        %964 = vmatpush2.bf16.msra.mxu0 0
        %965 = vmatprep.mubr.bf16.mxu0 0
        %966 = vmatmul.mubr.bf16.gmra.mxu0 %v928
        %v967 = vpop.f32.mrf.mxu0
        %v968 = vadd.f32 0.0, %v967
        %v969 = vpop.f32.mrf.mxu0
        %v970 = vpop.f32.mrf.mxu0
        %v971 = vpop.f32.mrf.mxu0
        %972 = vdwg.mxu0
        %v973 = vrcp.pop %v923
        %v974 = vmul.f32 %v968, %v973
        %976 = vrot.lane.b32.xlu0 %v974, 24
        %v977 = vpop.permute.xlu0 %976
        %vm979 = vcmask 261312
        %980 = vst.msk [vmem:[#allocation2] sm:$0xff] %vm979, %v977
        %v981 = vpack.c.bf16 %v517, %v517
        %983 = vrot.lane.b32.xlu0 %v981, 96
        %v984 = vpop.permute.xlu0 %983
        %v986 = vsel %vm524, %v981, 0
        %v989 = vsel %vm524, %v984, 0
        %991 = vmatprep.subr.bf16.mxu0 0
        %992 = vmatpush1.bf16.xpose.msra.mxu0 0
        %993 = vmatprep.subr.bf16.mxu0 0
        %994 = vmatpush1.bf16.xpose.msra.mxu0 0
        %995 = vmatprep.subr.bf16.mxu0 0
        %996 = vmatpush1.bf16.xpose.msra.mxu0 0
        %997 = vmatprep.subr.bf16.mxu0 0
        %998 = vmatpush1.bf16.xpose.msra.mxu0 0
        %999 = vmatprep.subr.bf16.mxu0 0
        %1000 = vmatpush1.bf16.xpose.msra.mxu0 0
        %1001 = vmatprep.subr.bf16.mxu0 0
        %1002 = vmatpush1.bf16.xpose.msra.mxu0 0
        %1003 = vmatprep.subr.bf16.mxu0 0
        %1004 = vmatpush1.bf16.xpose.msra.mxu0 0
        %1005 = vmatprep.subr.bf16.mxu0 0
        %1006 = vmatpush1.bf16.xpose.msra.mxu0 %v989
        %1007 = vmatprep.subr.bf16.mxu0 0
        %1008 = vmatpush2.bf16.xpose.msra.mxu0 0
        %1009 = vmatprep.subr.bf16.mxu0 0
        %1010 = vmatpush2.bf16.xpose.msra.mxu0 0
        %1011 = vmatprep.subr.bf16.mxu0 0
        %1012 = vmatpush2.bf16.xpose.msra.mxu0 0
        %1013 = vmatprep.subr.bf16.mxu0 0
        %1014 = vmatpush2.bf16.xpose.msra.mxu0 0
        %1015 = vmatprep.subr.bf16.mxu0 0
        %1016 = vmatpush2.bf16.xpose.msra.mxu0 0
        %1017 = vmatprep.subr.bf16.mxu0 0
        %1018 = vmatpush2.bf16.xpose.msra.mxu0 0
        %1019 = vmatprep.subr.bf16.mxu0 0
        %1020 = vmatpush2.bf16.xpose.msra.mxu0 0
        %1021 = vmatprep.subr.bf16.mxu0 0
        %1022 = vmatpush2.bf16.xpose.msra.mxu0 0
        %1023 = vmatprep.mubr.bf16.mxu0 0
        %1024 = vmatmul.mubr.bf16.gmra.mxu0 %v986
        %v1025 = vpop.f32.mrf.mxu0
        %v1026 = vadd.f32 0.0, %v1025
        %v1027 = vpop.f32.mrf.mxu0
        %v1028 = vpop.f32.mrf.mxu0
        %v1029 = vpop.f32.mrf.mxu0
        %1030 = vdwg.mxu0
        %v1031 = vsel %vm524, %v1026, -inf
        %1032 = vmax.xlane.f32.xlu0 %v1031
        %v1033 = vpop.xlane.xlu0 %1032
        %v1034 = vsub.f32 %v1026, %v1033
        %v1035 = vmul.f32 %v1034, 1.442695
        %v1036 = vpow.pop %v1035
        %v1037 = vsel %vm524, %v1036, 0.0
        %1038 = vadd.xlane.f32.xlu0 %v1037
        %v1039 = vpop.xlane.xlu0 %1038
        %v1040 = vpack.c.bf16 %v1036, %v1036
        %1041 = vrot.lane.b32.xlu0 %v981, 64
        %v1042 = vpop.permute.xlu0 %1041
        %v1044 = vsel %vm524, %v1040, 0
        %v1047 = vsel %vm586, %v1042, 0
        %1049 = vmatprep.subr.bf16.mxu0 0
        %1050 = vmatpush1.bf16.msra.mxu0 0
        %1051 = vmatprep.subr.bf16.mxu0 0
        %1052 = vmatpush1.bf16.msra.mxu0 0
        %1053 = vmatprep.subr.bf16.mxu0 0
        %1054 = vmatpush1.bf16.msra.mxu0 0
        %1055 = vmatprep.subr.bf16.mxu0 0
        %1056 = vmatpush1.bf16.msra.mxu0 0
        %1057 = vmatprep.subr.bf16.mxu0 0
        %1058 = vmatpush1.bf16.msra.mxu0 0
        %1059 = vmatprep.subr.bf16.mxu0 0
        %1060 = vmatpush1.bf16.msra.mxu0 0
        %1061 = vmatprep.subr.bf16.mxu0 0
        %1062 = vmatpush1.bf16.msra.mxu0 0
        %1063 = vmatprep.subr.bf16.mxu0 0
        %1064 = vmatpush1.bf16.msra.mxu0 %v1047
        %1065 = vmatprep.subr.bf16.mxu0 0
        %1066 = vmatpush2.bf16.msra.mxu0 0
        %1067 = vmatprep.subr.bf16.mxu0 0
        %1068 = vmatpush2.bf16.msra.mxu0 0
        %1069 = vmatprep.subr.bf16.mxu0 0
        %1070 = vmatpush2.bf16.msra.mxu0 0
        %1071 = vmatprep.subr.bf16.mxu0 0
        %1072 = vmatpush2.bf16.msra.mxu0 0
        %1073 = vmatprep.subr.bf16.mxu0 0
        %1074 = vmatpush2.bf16.msra.mxu0 0
        %1075 = vmatprep.subr.bf16.mxu0 0
        %1076 = vmatpush2.bf16.msra.mxu0 0
        %1077 = vmatprep.subr.bf16.mxu0 0
        %1078 = vmatpush2.bf16.msra.mxu0 0
        %1079 = vmatprep.subr.bf16.mxu0 0
        %1080 = vmatpush2.bf16.msra.mxu0 0
        %1081 = vmatprep.mubr.bf16.mxu0 0
        %1082 = vmatmul.mubr.bf16.gmra.mxu0 %v1044
        %v1083 = vpop.f32.mrf.mxu0
        %v1084 = vadd.f32 0.0, %v1083
        %v1085 = vpop.f32.mrf.mxu0
        %v1086 = vpop.f32.mrf.mxu0
        %v1087 = vpop.f32.mrf.mxu0
        %1088 = vdwg.mxu0
        %v1089 = vrcp.pop %v1039
        %v1090 = vmul.f32 %v1084, %v1089
        %1091 = vst.msk [vmem:[#allocation2 + $0x8] sm:$0xff] %vm524, %v1090
        %1092 = vrot.lane.b32.xlu0 %v981, 120
        %v1093 = vpop.permute.xlu0 %1092
        %1094 = vrot.lane.b32.xlu0 %v981, 88
        %v1095 = vpop.permute.xlu0 %1094
        %v1097 = vsel %vm524, %v1093, 0
        %v1100 = vsel %vm524, %v1095, 0
        %1102 = vmatprep.subr.bf16.mxu0 0
        %1103 = vmatpush1.bf16.xpose.msra.mxu0 0
        %1104 = vmatprep.subr.bf16.mxu0 0
        %1105 = vmatpush1.bf16.xpose.msra.mxu0 0
        %1106 = vmatprep.subr.bf16.mxu0 0
        %1107 = vmatpush1.bf16.xpose.msra.mxu0 0
        %1108 = vmatprep.subr.bf16.mxu0 0
        %1109 = vmatpush1.bf16.xpose.msra.mxu0 0
        %1110 = vmatprep.subr.bf16.mxu0 0
        %1111 = vmatpush1.bf16.xpose.msra.mxu0 0
        %1112 = vmatprep.subr.bf16.mxu0 0
        %1113 = vmatpush1.bf16.xpose.msra.mxu0 0
        %1114 = vmatprep.subr.bf16.mxu0 0
        %1115 = vmatpush1.bf16.xpose.msra.mxu0 0
        %1116 = vmatprep.subr.bf16.mxu0 0
        %1117 = vmatpush1.bf16.xpose.msra.mxu0 %v1100
        %1118 = vmatprep.subr.bf16.mxu0 0
        %1119 = vmatpush2.bf16.xpose.msra.mxu0 0
        %1120 = vmatprep.subr.bf16.mxu0 0
        %1121 = vmatpush2.bf16.xpose.msra.mxu0 0
        %1122 = vmatprep.subr.bf16.mxu0 0
        %1123 = vmatpush2.bf16.xpose.msra.mxu0 0
        %1124 = vmatprep.subr.bf16.mxu0 0
        %1125 = vmatpush2.bf16.xpose.msra.mxu0 0
        %1126 = vmatprep.subr.bf16.mxu0 0
        %1127 = vmatpush2.bf16.xpose.msra.mxu0 0
        %1128 = vmatprep.subr.bf16.mxu0 0
        %1129 = vmatpush2.bf16.xpose.msra.mxu0 0
        %1130 = vmatprep.subr.bf16.mxu0 0
        %1131 = vmatpush2.bf16.xpose.msra.mxu0 0
        %1132 = vmatprep.subr.bf16.mxu0 0
        %1133 = vmatpush2.bf16.xpose.msra.mxu0 0
        %1134 = vmatprep.mubr.bf16.mxu0 0
        %1135 = vmatmul.mubr.bf16.gmra.mxu0 %v1097
        %v1136 = vpop.f32.mrf.mxu0
        %v1137 = vadd.f32 0.0, %v1136
        %v1138 = vpop.f32.mrf.mxu0
        %v1139 = vpop.f32.mrf.mxu0
        %v1140 = vpop.f32.mrf.mxu0
        %1141 = vdwg.mxu0
        %v1142 = vsel %vm524, %v1137, -inf
        %1143 = vmax.xlane.f32.xlu0 %v1142
        %v1144 = vpop.xlane.xlu0 %1143
        %v1145 = vsub.f32 %v1137, %v1144
        %v1146 = vmul.f32 %v1145, 1.442695
        %v1147 = vpow.pop %v1146
        %v1148 = vsel %vm524, %v1147, 0.0
        %1149 = vadd.xlane.f32.xlu0 %v1148
        %v1150 = vpop.xlane.xlu0 %1149
        %v1151 = vpack.c.bf16 %v1147, %v1147
        %1152 = vrot.lane.b32.xlu0 %v981, 56
        %v1153 = vpop.permute.xlu0 %1152
        %v1155 = vsel %vm524, %v1151, 0
        %v1158 = vsel %vm586, %v1153, 0
        %1160 = vmatprep.subr.bf16.mxu0 0
        %1161 = vmatpush1.bf16.msra.mxu0 0
        %1162 = vmatprep.subr.bf16.mxu0 0
        %1163 = vmatpush1.bf16.msra.mxu0 0
        %1164 = vmatprep.subr.bf16.mxu0 0
        %1165 = vmatpush1.bf16.msra.mxu0 0
        %1166 = vmatprep.subr.bf16.mxu0 0
        %1167 = vmatpush1.bf16.msra.mxu0 0
        %1168 = vmatprep.subr.bf16.mxu0 0
        %1169 = vmatpush1.bf16.msra.mxu0 0
        %1170 = vmatprep.subr.bf16.mxu0 0
        %1171 = vmatpush1.bf16.msra.mxu0 0
        %1172 = vmatprep.subr.bf16.mxu0 0
        %1173 = vmatpush1.bf16.msra.mxu0 0
        %1174 = vmatprep.subr.bf16.mxu0 0
        %1175 = vmatpush1.bf16.msra.mxu0 %v1158
        %1176 = vmatprep.subr.bf16.mxu0 0
        %1177 = vmatpush2.bf16.msra.mxu0 0
        %1178 = vmatprep.subr.bf16.mxu0 0
        %1179 = vmatpush2.bf16.msra.mxu0 0
        %1180 = vmatprep.subr.bf16.mxu0 0
        %1181 = vmatpush2.bf16.msra.mxu0 0
        %1182 = vmatprep.subr.bf16.mxu0 0
        %1183 = vmatpush2.bf16.msra.mxu0 0
        %1184 = vmatprep.subr.bf16.mxu0 0
        %1185 = vmatpush2.bf16.msra.mxu0 0
        %1186 = vmatprep.subr.bf16.mxu0 0
        %1187 = vmatpush2.bf16.msra.mxu0 0
        %1188 = vmatprep.subr.bf16.mxu0 0
        %1189 = vmatpush2.bf16.msra.mxu0 0
        %1190 = vmatprep.subr.bf16.mxu0 0
        %1191 = vmatpush2.bf16.msra.mxu0 0
        %1192 = vmatprep.mubr.bf16.mxu0 0
        %1193 = vmatmul.mubr.bf16.gmra.mxu0 %v1155
        %v1194 = vpop.f32.mrf.mxu0
        %v1195 = vadd.f32 0.0, %v1194
        %v1196 = vpop.f32.mrf.mxu0
        %v1197 = vpop.f32.mrf.mxu0
        %v1198 = vpop.f32.mrf.mxu0
        %1199 = vdwg.mxu0
        %v1200 = vrcp.pop %v1150
        %v1201 = vmul.f32 %v1195, %v1200
        %1203 = vrot.lane.b32.xlu0 %v1201, 8
        %v1204 = vpop.permute.xlu0 %1203
        %1206 = vst.msk [vmem:[#allocation2 + $0x8] sm:$0xff] %vm747, %v1204
        %1207 = vrot.lane.b32.xlu0 %v981, 112
        %v1208 = vpop.permute.xlu0 %1207
        %1209 = vrot.lane.b32.xlu0 %v981, 80
        %v1210 = vpop.permute.xlu0 %1209
        %v1212 = vsel %vm524, %v1208, 0
        %v1215 = vsel %vm524, %v1210, 0
        %1217 = vmatprep.subr.bf16.mxu0 0
        %1218 = vmatpush1.bf16.xpose.msra.mxu0 0
        %1219 = vmatprep.subr.bf16.mxu0 0
        %1220 = vmatpush1.bf16.xpose.msra.mxu0 0
        %1221 = vmatprep.subr.bf16.mxu0 0
        %1222 = vmatpush1.bf16.xpose.msra.mxu0 0
        %1223 = vmatprep.subr.bf16.mxu0 0
        %1224 = vmatpush1.bf16.xpose.msra.mxu0 0
        %1225 = vmatprep.subr.bf16.mxu0 0
        %1226 = vmatpush1.bf16.xpose.msra.mxu0 0
        %1227 = vmatprep.subr.bf16.mxu0 0
        %1228 = vmatpush1.bf16.xpose.msra.mxu0 0
        %1229 = vmatprep.subr.bf16.mxu0 0
        %1230 = vmatpush1.bf16.xpose.msra.mxu0 0
        %1231 = vmatprep.subr.bf16.mxu0 0
        %1232 = vmatpush1.bf16.xpose.msra.mxu0 %v1215
        %1233 = vmatprep.subr.bf16.mxu0 0
        %1234 = vmatpush2.bf16.xpose.msra.mxu0 0
        %1235 = vmatprep.subr.bf16.mxu0 0
        %1236 = vmatpush2.bf16.xpose.msra.mxu0 0
        %1237 = vmatprep.subr.bf16.mxu0 0
        %1238 = vmatpush2.bf16.xpose.msra.mxu0 0
        %1239 = vmatprep.subr.bf16.mxu0 0
        %1240 = vmatpush2.bf16.xpose.msra.mxu0 0
        %1241 = vmatprep.subr.bf16.mxu0 0
        %1242 = vmatpush2.bf16.xpose.msra.mxu0 0
        %1243 = vmatprep.subr.bf16.mxu0 0
        %1244 = vmatpush2.bf16.xpose.msra.mxu0 0
        %1245 = vmatprep.subr.bf16.mxu0 0
        %1246 = vmatpush2.bf16.xpose.msra.mxu0 0
        %1247 = vmatprep.subr.bf16.mxu0 0
        %1248 = vmatpush2.bf16.xpose.msra.mxu0 0
        %1249 = vmatprep.mubr.bf16.mxu0 0
        %1250 = vmatmul.mubr.bf16.gmra.mxu0 %v1212
        %v1251 = vpop.f32.mrf.mxu0
        %v1252 = vadd.f32 0.0, %v1251
        %v1253 = vpop.f32.mrf.mxu0
        %v1254 = vpop.f32.mrf.mxu0
        %v1255 = vpop.f32.mrf.mxu0
        %1256 = vdwg.mxu0
        %v1257 = vsel %vm524, %v1252, -inf
        %1258 = vmax.xlane.f32.xlu0 %v1257
        %v1259 = vpop.xlane.xlu0 %1258
        %v1260 = vsub.f32 %v1252, %v1259
        %v1261 = vmul.f32 %v1260, 1.442695
        %v1262 = vpow.pop %v1261
        %v1263 = vsel %vm524, %v1262, 0.0
        %1264 = vadd.xlane.f32.xlu0 %v1263
        %v1265 = vpop.xlane.xlu0 %1264
        %v1266 = vpack.c.bf16 %v1262, %v1262
        %1267 = vrot.lane.b32.xlu0 %v981, 48
        %v1268 = vpop.permute.xlu0 %1267
        %v1270 = vsel %vm524, %v1266, 0
        %v1273 = vsel %vm586, %v1268, 0
        %1275 = vmatprep.subr.bf16.mxu0 0
        %1276 = vmatpush1.bf16.msra.mxu0 0
        %1277 = vmatprep.subr.bf16.mxu0 0
        %1278 = vmatpush1.bf16.msra.mxu0 0
        %1279 = vmatprep.subr.bf16.mxu0 0
        %1280 = vmatpush1.bf16.msra.mxu0 0
        %1281 = vmatprep.subr.bf16.mxu0 0
        %1282 = vmatpush1.bf16.msra.mxu0 0
        %1283 = vmatprep.subr.bf16.mxu0 0
        %1284 = vmatpush1.bf16.msra.mxu0 0
        %1285 = vmatprep.subr.bf16.mxu0 0
        %1286 = vmatpush1.bf16.msra.mxu0 0
        %1287 = vmatprep.subr.bf16.mxu0 0
        %1288 = vmatpush1.bf16.msra.mxu0 0
        %1289 = vmatprep.subr.bf16.mxu0 0
        %1290 = vmatpush1.bf16.msra.mxu0 %v1273
        %1291 = vmatprep.subr.bf16.mxu0 0
        %1292 = vmatpush2.bf16.msra.mxu0 0
        %1293 = vmatprep.subr.bf16.mxu0 0
        %1294 = vmatpush2.bf16.msra.mxu0 0
        %1295 = vmatprep.subr.bf16.mxu0 0
        %1296 = vmatpush2.bf16.msra.mxu0 0
        %1297 = vmatprep.subr.bf16.mxu0 0
        %1298 = vmatpush2.bf16.msra.mxu0 0
        %1299 = vmatprep.subr.bf16.mxu0 0
        %1300 = vmatpush2.bf16.msra.mxu0 0
        %1301 = vmatprep.subr.bf16.mxu0 0
        %1302 = vmatpush2.bf16.msra.mxu0 0
        %1303 = vmatprep.subr.bf16.mxu0 0
        %1304 = vmatpush2.bf16.msra.mxu0 0
        %1305 = vmatprep.subr.bf16.mxu0 0
        %1306 = vmatpush2.bf16.msra.mxu0 0
        %1307 = vmatprep.mubr.bf16.mxu0 0
        %1308 = vmatmul.mubr.bf16.gmra.mxu0 %v1270
        %v1309 = vpop.f32.mrf.mxu0
        %v1310 = vadd.f32 0.0, %v1309
        %v1311 = vpop.f32.mrf.mxu0
        %v1312 = vpop.f32.mrf.mxu0
        %v1313 = vpop.f32.mrf.mxu0
        %1314 = vdwg.mxu0
        %v1315 = vrcp.pop %v1265
        %v1316 = vmul.f32 %v1310, %v1315
        %1318 = vrot.lane.b32.xlu0 %v1316, 16
        %v1319 = vpop.permute.xlu0 %1318
        %1321 = vst.msk [vmem:[#allocation2 + $0x8] sm:$0xff] %vm863, %v1319
        %1322 = vrot.lane.b32.xlu0 %v981, 104
        %v1323 = vpop.permute.xlu0 %1322
        %1324 = vrot.lane.b32.xlu0 %v981, 72
        %v1325 = vpop.permute.xlu0 %1324
        %v1327 = vsel %vm524, %v1323, 0
        %v1330 = vsel %vm524, %v1325, 0
        %1332 = vmatprep.subr.bf16.mxu0 0
        %1333 = vmatpush1.bf16.xpose.msra.mxu0 0
        %1334 = vmatprep.subr.bf16.mxu0 0
        %1335 = vmatpush1.bf16.xpose.msra.mxu0 0
        %1336 = vmatprep.subr.bf16.mxu0 0
        %1337 = vmatpush1.bf16.xpose.msra.mxu0 0
        %1338 = vmatprep.subr.bf16.mxu0 0
        %1339 = vmatpush1.bf16.xpose.msra.mxu0 0
        %1340 = vmatprep.subr.bf16.mxu0 0
        %1341 = vmatpush1.bf16.xpose.msra.mxu0 0
        %1342 = vmatprep.subr.bf16.mxu0 0
        %1343 = vmatpush1.bf16.xpose.msra.mxu0 0
        %1344 = vmatprep.subr.bf16.mxu0 0
        %1345 = vmatpush1.bf16.xpose.msra.mxu0 0
        %1346 = vmatprep.subr.bf16.mxu0 0
        %1347 = vmatpush1.bf16.xpose.msra.mxu0 %v1330
        %1348 = vmatprep.subr.bf16.mxu0 0
        %1349 = vmatpush2.bf16.xpose.msra.mxu0 0
        %1350 = vmatprep.subr.bf16.mxu0 0
        %1351 = vmatpush2.bf16.xpose.msra.mxu0 0
        %1352 = vmatprep.subr.bf16.mxu0 0
        %1353 = vmatpush2.bf16.xpose.msra.mxu0 0
        %1354 = vmatprep.subr.bf16.mxu0 0
        %1355 = vmatpush2.bf16.xpose.msra.mxu0 0
        %1356 = vmatprep.subr.bf16.mxu0 0
        %1357 = vmatpush2.bf16.xpose.msra.mxu0 0
        %1358 = vmatprep.subr.bf16.mxu0 0
        %1359 = vmatpush2.bf16.xpose.msra.mxu0 0
        %1360 = vmatprep.subr.bf16.mxu0 0
        %1361 = vmatpush2.bf16.xpose.msra.mxu0 0
        %1362 = vmatprep.subr.bf16.mxu0 0
        %1363 = vmatpush2.bf16.xpose.msra.mxu0 0
        %1364 = vmatprep.mubr.bf16.mxu0 0
        %1365 = vmatmul.mubr.bf16.gmra.mxu0 %v1327
        %v1366 = vpop.f32.mrf.mxu0
        %v1367 = vadd.f32 0.0, %v1366
        %v1368 = vpop.f32.mrf.mxu0
        %v1369 = vpop.f32.mrf.mxu0
        %v1370 = vpop.f32.mrf.mxu0
        %1371 = vdwg.mxu0
        %v1372 = vsel %vm524, %v1367, -inf
        %1373 = vmax.xlane.f32.xlu0 %v1372
        %v1374 = vpop.xlane.xlu0 %1373
        %v1375 = vsub.f32 %v1367, %v1374
        %v1376 = vmul.f32 %v1375, 1.442695
        %v1377 = vpow.pop %v1376
        %v1378 = vsel %vm524, %v1377, 0.0
        %1379 = vadd.xlane.f32.xlu0 %v1378
        %v1380 = vpop.xlane.xlu0 %1379
        %v1381 = vpack.c.bf16 %v1377, %v1377
        %1382 = vrot.lane.b32.xlu0 %v981, 40
        %v1383 = vpop.permute.xlu0 %1382
        %v1385 = vsel %vm524, %v1381, 0
        %v1388 = vsel %vm586, %v1383, 0
        %1390 = vmatprep.subr.bf16.mxu0 0
        %1391 = vmatpush1.bf16.msra.mxu0 0
        %1392 = vmatprep.subr.bf16.mxu0 0
        %1393 = vmatpush1.bf16.msra.mxu0 0
        %1394 = vmatprep.subr.bf16.mxu0 0
        %1395 = vmatpush1.bf16.msra.mxu0 0
        %1396 = vmatprep.subr.bf16.mxu0 0
        %1397 = vmatpush1.bf16.msra.mxu0 0
        %1398 = vmatprep.subr.bf16.mxu0 0
        %1399 = vmatpush1.bf16.msra.mxu0 0
        %1400 = vmatprep.subr.bf16.mxu0 0
        %1401 = vmatpush1.bf16.msra.mxu0 0
        %1402 = vmatprep.subr.bf16.mxu0 0
        %1403 = vmatpush1.bf16.msra.mxu0 0
        %1404 = vmatprep.subr.bf16.mxu0 0
        %1405 = vmatpush1.bf16.msra.mxu0 %v1388
        %1406 = vmatprep.subr.bf16.mxu0 0
        %1407 = vmatpush2.bf16.msra.mxu0 0
        %1408 = vmatprep.subr.bf16.mxu0 0
        %1409 = vmatpush2.bf16.msra.mxu0 0
        %1410 = vmatprep.subr.bf16.mxu0 0
        %1411 = vmatpush2.bf16.msra.mxu0 0
        %1412 = vmatprep.subr.bf16.mxu0 0
        %1413 = vmatpush2.bf16.msra.mxu0 0
        %1414 = vmatprep.subr.bf16.mxu0 0
        %1415 = vmatpush2.bf16.msra.mxu0 0
        %1416 = vmatprep.subr.bf16.mxu0 0
        %1417 = vmatpush2.bf16.msra.mxu0 0
        %1418 = vmatprep.subr.bf16.mxu0 0
        %1419 = vmatpush2.bf16.msra.mxu0 0
        %1420 = vmatprep.subr.bf16.mxu0 0
        %1421 = vmatpush2.bf16.msra.mxu0 0
        %1422 = vmatprep.mubr.bf16.mxu0 0
        %1423 = vmatmul.mubr.bf16.gmra.mxu0 %v1385
        %v1424 = vpop.f32.mrf.mxu0
        %v1425 = vadd.f32 0.0, %v1424
        %v1426 = vpop.f32.mrf.mxu0
        %v1427 = vpop.f32.mrf.mxu0
        %v1428 = vpop.f32.mrf.mxu0
        %1429 = vdwg.mxu0
        %v1430 = vrcp.pop %v1380
        %v1431 = vmul.f32 %v1425, %v1430
        %1433 = vrot.lane.b32.xlu0 %v1431, 24
        %v1434 = vpop.permute.xlu0 %1433
        %1436 = vst.msk [vmem:[#allocation2 + $0x8] sm:$0xff] %vm979, %v1434
        %v1437 = vld [vmem:[%s437] sm:$0x3f]
        %v1438 = vld [vmem:[#allocation2] sm:$0xff]
        %v1439 = vld [vmem:[#allocation2 + $0x8] sm:$0xff]
        %v1440 = vpack.c.bf16 %v1439, %v1438
        %v1441 = vld [vmem:[%s420] sm:$0xf]
        %v1442 = vld [vmem:[%s420 + $0x4] sm:$0xf]
        %v1443 = vld [vmem:[%s420 + $0x8] sm:$0xf]
        %v1444 = vld [vmem:[%s420 + $0xc] sm:$0xf]
        %v1445 = vlaneseq
        %v1446 = vshrl.u32 %v1445, 7
        %v1447 = vsub.s32 0, %v1446
        %v1448 = vrot.slane %v1437, %v1447
        %v1453 = vunpack.c.l.b16 %v1441
        %v1454 = vunpack.c.l.b16 %v1442
        %v1455 = vunpack.c.l.b16 %v1443
        %v1456 = vunpack.c.l.b16 %v1444
        %v1457 = vpack.c.b16 %v1454, %v1453
        %v1458 = vpack.c.b16 %v1456, %v1455
        %v1462 = vsel %vm475, %v1440, 0
        %1464 = vmatprep.subr.bf16.mxu0 0
        %1465 = vmatpush1.bf16.msra.mxu0 0
        %1466 = vmatprep.subr.bf16.mxu0 0
        %1467 = vmatpush1.bf16.msra.mxu0 0
        %1468 = vmatprep.subr.bf16.mxu0 0
        %1469 = vmatpush1.bf16.msra.mxu0 0
        %1470 = vmatprep.subr.bf16.mxu0 0
        %1471 = vmatpush1.bf16.msra.mxu0 0
        %1472 = vmatprep.subr.bf16.mxu0 0
        %1473 = vmatpush1.bf16.msra.mxu0 0
        %1474 = vmatprep.subr.bf16.mxu0 0
        %1475 = vmatpush1.bf16.msra.mxu0 0
        %1476 = vmatprep.subr.bf16.mxu0 0
        %1477 = vmatpush1.bf16.msra.mxu0 %v1458
        %1478 = vmatprep.subr.bf16.mxu0 0
        %1479 = vmatpush1.bf16.msra.mxu0 %v1457
        %1480 = vmatprep.subr.bf16.mxu0 0
        %1481 = vmatpush2.bf16.msra.mxu0 0
        %1482 = vmatprep.subr.bf16.mxu0 0
        %1483 = vmatpush2.bf16.msra.mxu0 0
        %1484 = vmatprep.subr.bf16.mxu0 0
        %1485 = vmatpush2.bf16.msra.mxu0 0
        %1486 = vmatprep.subr.bf16.mxu0 0
        %1487 = vmatpush2.bf16.msra.mxu0 0
        %1488 = vmatprep.subr.bf16.mxu0 0
        %1489 = vmatpush2.bf16.msra.mxu0 0
        %1490 = vmatprep.subr.bf16.mxu0 0
        %1491 = vmatpush2.bf16.msra.mxu0 0
        %1492 = vmatprep.subr.bf16.mxu0 0
        %1493 = vmatpush2.bf16.msra.mxu0 0
        %1494 = vmatprep.subr.bf16.mxu0 0
        %1495 = vmatpush2.bf16.msra.mxu0 0
        %1496 = vmatprep.mubr.bf16.mxu0 0
        %1497 = vmatmul.mubr.bf16.gmra.mxu0 %v1462
        %v1498 = vpop.f32.mrf.mxu0
        %v1499 = vadd.f32 %v1448, %v1498
        %v1500 = vpop.f32.mrf.mxu0
        %v1501 = vpop.f32.mrf.mxu0
        %v1502 = vadd.f32 %v1448, %v1501
        %v1503 = vpop.f32.mrf.mxu0
        %1504 = vdwg.mxu0
        %v1505 = vadd.f32 %v449, %v1499
        %v1506 = vadd.f32 %v450, %v1502
        %v1507 = vsel %vm475, %v1505, 0.0
        %1508 = vadd.xlane.f32.xlu0 %v1507
        %v1509 = vpop.xlane.xlu0 %1508
        %v1510 = vsel %vm475, %v1506, 0.0
        %1511 = vadd.xlane.f32.xlu0 %v1510
        %v1512 = vpop.xlane.xlu0 %1511
        %v1513 = vrcp.pop 32.0
        %v1514 = vmul.f32 %v1509, %v1513
        %v1515 = vmul.f32 %v1512, %v1513
        %v1516 = vsub.f32 %v1505, %v1514
        %v1517 = vsub.f32 %v1506, %v1515
        %v1518 = vmul.f32 %v1516, %v1516
        %v1519 = vmul.f32 %v1517, %v1517
        %v1520 = vsel %vm475, %v1518, 0.0
        %1521 = vadd.xlane.f32.xlu0 %v1520
        %v1522 = vpop.xlane.xlu0 %1521
        %v1523 = vsel %vm475, %v1519, 0.0
        %1524 = vadd.xlane.f32.xlu0 %v1523
        %v1525 = vpop.xlane.xlu0 %1524
        %v1526 = vmul.f32 %v1522, %v1513
        %v1527 = vmul.f32 %v1525, %v1513
        %v1528 = vadd.f32 %v1526, 1e-05
        %v1529 = vadd.f32 %v1527, 1e-05
        %v1530 = vrsqrt.pop %v1528
        %v1531 = vrsqrt.pop %v1529
        %v1532 = vmul.f32 %v1516, %v1530
        %v1533 = vmul.f32 %v1517, %v1531
        %v1534 = vlaneseq
        %v1535 = vshrl.u32 %v1534, 7
        %v1536 = vsub.s32 1, %v1535
        %v1537 = vrot.slane %v1437, %v1536
        %v1538 = vmul.f32 %v1532, %v1537
        %v1539 = vmul.f32 %v1533, %v1537
        %v1540 = vlaneseq
        %v1541 = vshrl.u32 %v1540, 7
        %v1542 = vsub.s32 2, %v1541
        %v1543 = vrot.slane %v1437, %v1542
        %v1544 = vadd.f32 %v1538, %v1543
        %v1545 = vadd.f32 %v1539, %v1543
        %v1546 = vpack.c.bf16 %v1545, %v1544
        %v1547 = vld [vmem:[%s425] sm:$0xf]
        %v1548 = vld [vmem:[%s425 + $0x4] sm:$0xf]
        %v1549 = vld [vmem:[%s425 + $0x8] sm:$0xf]
        %v1550 = vld [vmem:[%s425 + $0xc] sm:$0xf]
        %v1551 = vld [vmem:[%s428] sm:$0x1]
        %v1553 = vlaneseq
        %v1554 = vshrl.u32 %v1553, 7
        %v1555 = vsub.s32 0, %v1554
        %v1556 = vrot.slane %v1551, %v1555
        %v1562 = vunpack.c.l.b16 %v1547
        %v1563 = vunpack.c.l.b16 %v1548
        %v1564 = vunpack.c.l.b16 %v1549
        %v1565 = vunpack.c.l.b16 %v1550
        %v1566 = vpack.c.b16 %v1563, %v1562
        %v1567 = vpack.c.b16 %v1565, %v1564
        %v1571 = vsel %vm475, %v1546, 0
        %1573 = vmatprep.subr.bf16.mxu0 0
        %1574 = vmatpush1.bf16.msra.mxu0 0
        %1575 = vmatprep.subr.bf16.mxu0 0
        %1576 = vmatpush1.bf16.msra.mxu0 0
        %1577 = vmatprep.subr.bf16.mxu0 0
        %1578 = vmatpush1.bf16.msra.mxu0 0
        %1579 = vmatprep.subr.bf16.mxu0 0
        %1580 = vmatpush1.bf16.msra.mxu0 0
        %1581 = vmatprep.subr.bf16.mxu0 0
        %1582 = vmatpush1.bf16.msra.mxu0 0
        %1583 = vmatprep.subr.bf16.mxu0 0
        %1584 = vmatpush1.bf16.msra.mxu0 0
        %1585 = vmatprep.subr.bf16.mxu0 0
        %1586 = vmatpush1.bf16.msra.mxu0 %v1567
        %1587 = vmatprep.subr.bf16.mxu0 0
        %1588 = vmatpush1.bf16.msra.mxu0 %v1566
        %1589 = vmatprep.subr.bf16.mxu0 0
        %1590 = vmatpush2.bf16.msra.mxu0 0
        %1591 = vmatprep.subr.bf16.mxu0 0
        %1592 = vmatpush2.bf16.msra.mxu0 0
        %1593 = vmatprep.subr.bf16.mxu0 0
        %1594 = vmatpush2.bf16.msra.mxu0 0
        %1595 = vmatprep.subr.bf16.mxu0 0
        %1596 = vmatpush2.bf16.msra.mxu0 0
        %1597 = vmatprep.subr.bf16.mxu0 0
        %1598 = vmatpush2.bf16.msra.mxu0 0
        %1599 = vmatprep.subr.bf16.mxu0 0
        %1600 = vmatpush2.bf16.msra.mxu0 0
        %1601 = vmatprep.subr.bf16.mxu0 0
        %1602 = vmatpush2.bf16.msra.mxu0 0
        %1603 = vmatprep.subr.bf16.mxu0 0
        %1604 = vmatpush2.bf16.msra.mxu0 0
        %1605 = vmatprep.mubr.bf16.mxu0 0
        %1606 = vmatmul.mubr.bf16.gmra.mxu0 %v1571
        %v1607 = vpop.f32.mrf.mxu0
        %v1608 = vadd.f32 %v1556, %v1607
        %v1609 = vpop.f32.mrf.mxu0
        %v1610 = vpop.f32.mrf.mxu0
        %v1611 = vadd.f32 %v1556, %v1610
        %v1612 = vpop.f32.mrf.mxu0
        %1613 = vdwg.mxu0
        %v1614 = vmax.f32 %v1608, 0.0
        %v1615 = vmax.f32 %v1611, 0.0
        %v1616 = vpack.c.bf16 %v1615, %v1614
        %v1617 = vld [vmem:[%s433] sm:$0xf]
        %v1618 = vld [vmem:[%s433 + $0x4] sm:$0xf]
        %v1619 = vld [vmem:[%s433 + $0x8] sm:$0xf]
        %v1620 = vld [vmem:[%s433 + $0xc] sm:$0xf]
        %v1621 = vld [vmem:[%s433 + $0x10] sm:$0xf]
        %v1622 = vld [vmem:[%s433 + $0x14] sm:$0xf]
        %v1623 = vld [vmem:[%s433 + $0x18] sm:$0xf]
        %v1624 = vld [vmem:[%s433 + $0x1c] sm:$0xf]
        %v1625 = vlaneseq
        %v1626 = vshrl.u32 %v1625, 7
        %v1627 = vsub.s32 3, %v1626
        %v1628 = vrot.slane %v1437, %v1627
        %v1637 = vunpack.c.l.b16 %v1617
        %v1638 = vunpack.c.l.b16 %v1618
        %v1639 = vunpack.c.l.b16 %v1619
        %v1640 = vunpack.c.l.b16 %v1620
        %v1641 = vunpack.c.l.b16 %v1621
        %v1642 = vunpack.c.l.b16 %v1622
        %v1643 = vunpack.c.l.b16 %v1623
        %v1644 = vunpack.c.l.b16 %v1624
        %v1645 = vpack.c.b16 %v1638, %v1637
        %v1646 = vpack.c.b16 %v1640, %v1639
        %v1647 = vpack.c.b16 %v1642, %v1641
        %v1648 = vpack.c.b16 %v1644, %v1643
        %vm1653 = vcmask 523264
        %v1655 = vsel %vm1653, %v1616, 0
        %1657 = vmatprep.subr.bf16.mxu0 0
        %1658 = vmatpush1.bf16.msra.mxu0 0
        %1659 = vmatprep.subr.bf16.mxu0 0
        %1660 = vmatpush1.bf16.msra.mxu0 0
        %1661 = vmatprep.subr.bf16.mxu0 0
        %1662 = vmatpush1.bf16.msra.mxu0 0
        %1663 = vmatprep.subr.bf16.mxu0 0
        %1664 = vmatpush1.bf16.msra.mxu0 0
        %1665 = vmatprep.subr.bf16.mxu0 0
        %1666 = vmatpush1.bf16.msra.mxu0 %v1648
        %1667 = vmatprep.subr.bf16.mxu0 0
        %1668 = vmatpush1.bf16.msra.mxu0 %v1647
        %1669 = vmatprep.subr.bf16.mxu0 0
        %1670 = vmatpush1.bf16.msra.mxu0 %v1646
        %1671 = vmatprep.subr.bf16.mxu0 0
        %1672 = vmatpush1.bf16.msra.mxu0 %v1645
        %1673 = vmatprep.subr.bf16.mxu0 0
        %1674 = vmatpush2.bf16.msra.mxu0 0
        %1675 = vmatprep.subr.bf16.mxu0 0
        %1676 = vmatpush2.bf16.msra.mxu0 0
        %1677 = vmatprep.subr.bf16.mxu0 0
        %1678 = vmatpush2.bf16.msra.mxu0 0
        %1679 = vmatprep.subr.bf16.mxu0 0
        %1680 = vmatpush2.bf16.msra.mxu0 0
        %1681 = vmatprep.subr.bf16.mxu0 0
        %1682 = vmatpush2.bf16.msra.mxu0 0
        %1683 = vmatprep.subr.bf16.mxu0 0
        %1684 = vmatpush2.bf16.msra.mxu0 0
        %1685 = vmatprep.subr.bf16.mxu0 0
        %1686 = vmatpush2.bf16.msra.mxu0 0
        %1687 = vmatprep.subr.bf16.mxu0 0
        %1688 = vmatpush2.bf16.msra.mxu0 0
        %1689 = vmatprep.mubr.bf16.mxu0 0
        %1690 = vmatmul.mubr.bf16.gmra.mxu0 %v1655
        %v1691 = vpop.f32.mrf.mxu0
        %v1692 = vadd.f32 %v1628, %v1691
        %v1693 = vpop.f32.mrf.mxu0
        %v1694 = vpop.f32.mrf.mxu0
        %v1695 = vadd.f32 %v1628, %v1694
        %v1696 = vpop.f32.mrf.mxu0
        %1697 = vdwg.mxu0
        %v1698 = vadd.f32 %v1544, %v1692
        %v1699 = vadd.f32 %v1545, %v1695
        %v1700 = vsel %vm475, %v1698, 0.0
        %1701 = vadd.xlane.f32.xlu0 %v1700
        %v1702 = vpop.xlane.xlu0 %1701
        %v1703 = vsel %vm475, %v1699, 0.0
        %1704 = vadd.xlane.f32.xlu0 %v1703
        %v1705 = vpop.xlane.xlu0 %1704
        %v1706 = vmul.f32 %v1702, %v1513
        %v1707 = vmul.f32 %v1705, %v1513
        %v1708 = vsub.f32 %v1698, %v1706
        %v1709 = vsub.f32 %v1699, %v1707
        %v1710 = vmul.f32 %v1708, %v1708
        %v1711 = vmul.f32 %v1709, %v1709
        %v1712 = vsel %vm475, %v1710, 0.0
        %1713 = vadd.xlane.f32.xlu0 %v1712
        %v1714 = vpop.xlane.xlu0 %1713
        %v1715 = vsel %vm475, %v1711, 0.0
        %1716 = vadd.xlane.f32.xlu0 %v1715
        %v1717 = vpop.xlane.xlu0 %1716
        %v1718 = vmul.f32 %v1714, %v1513
        %v1719 = vmul.f32 %v1717, %v1513
        %v1720 = vadd.f32 %v1718, 1e-05
        %v1721 = vadd.f32 %v1719, 1e-05
        %v1722 = vrsqrt.pop %v1720
        %v1723 = vrsqrt.pop %v1721
        %v1724 = vmul.f32 %v1708, %v1722
        %v1725 = vmul.f32 %v1709, %v1723
        %v1726 = vlaneseq
        %v1727 = vshrl.u32 %v1726, 7
        %v1728 = vsub.s32 4, %v1727
        %v1729 = vrot.slane %v1437, %v1728
        %v1730 = vmul.f32 %v1724, %v1729
        %v1731 = vmul.f32 %v1725, %v1729
        %v1732 = vlaneseq
        %v1733 = vshrl.u32 %v1732, 7
        %v1734 = vsub.s32 5, %v1733
        %v1735 = vrot.slane %v1437, %v1734
        %v1736 = vadd.f32 %v1730, %v1735
        %v1737 = vadd.f32 %v1731, %v1735
        %1738 = vst.msk [vmem:[#allocation6] sm:$0xff] %vm475, %v1736
        %1739 = vst.msk [vmem:[#allocation6 + $0x8] sm:$0xff] %vm475, %v1737
        // Predicated region
        $region61: #{tpu_custom_call.1} parent=51 // pred_check
          %p1740 = pneg %p259
        $region62: #{tpu_custom_call.1} parent=51 // pred_check_branch
          %1742 = sbr.rel (%p1740) target = $region64
        $region63: #{tpu_custom_call.1} parent=51 // pred_region
          %s1743 = smul.u32 2, %s25
          %s1745 = ssub.s32 256, 256
          %1746 = vsyncadd [#allocation5], %s1745
          %s1747 = smul.addr %s1743, 128
          %s1748 = scalar_lea.hbm %s8, %s1747
          %s1749 = sshll.u32 [#allocation6], 4
          %s1750 = int_to_ptr.vmem [resolvable:$true] %s1749
          %1755 = dma.vmem_to_hbm [thread:$0]  %s1750, 256, %s1748, [#allocation5], 128, 128, 8
        $region64: #{tpu_custom_call.1} parent=51 // pred_fallthru
          _
        // Predicated region
        $region65: #{tpu_custom_call.1} parent=51 // pred_check
          %p1756 = pneg %p259
        $region66: #{tpu_custom_call.1} parent=51 // pred_check_branch
          %1758 = sbr.rel (%p1756) target = $region68
        $region67: #{tpu_custom_call.1} parent=51 // pred_region
          %1759 = dma.done [#allocation5], 256
        $region68: #{tpu_custom_call.1} parent=51 // pred_fallthru
          _
      $region52: #{tpu_custom_call.1} parent=5 // pred_fallthru
        _
      %p1760 = scmp.le.s32.totalorder 2, %s16
      // Predicated region
      $region69: #{tpu_custom_call.1} parent=5 // pred_check
        %p1761 = pneg %p1760
      $region70: #{tpu_custom_call.1} parent=5 // pred_check_branch
        %1763 = sbr.rel (%p1761) target = $region72
      $region71: #{tpu_custom_call.1} parent=5 // pred_region
        %s1764 = ssub.s32 %s16, 2
      $region72: #{tpu_custom_call.1} parent=5 // pred_fallthru
        _
    $region6: #{tpu_custom_call.1} parent=1 // loop_footer
      %s20 = sadd.s32 1, %s16
    $region7: #{tpu_custom_call.1} parent=1 // loop_footer_branch
      %15 = sbr.rel target = $region3
    $region8: #{tpu_custom_call.1} parent=1 // loop_exit
      _
    %1765 = vsyncpa [#allocation4], 1
    %s1766 = scalar_lea.sflag [#allocation4], 1
    %1767 = vsyncpa %s1766, 1
    %1768 = vsyncpa [#allocation5], 1
    %s1769 = scalar_lea.sflag [#allocation5], 1
    %1770 = vsyncpa %s1769, 1

</llo_original>
